<compile_context>
chip_gen: v7x
topology: tpu7x:2x2x1
jax: 0.10.0
libtpu: 0.0.40
codegen_flags: <defaults>
</compile_context>

<pallas_src>
import jax
import jax.numpy as jnp
from jax import lax
from jax.experimental import pallas as pl
from jax.experimental.pallas import tpu as pltpu  # noqa: F401  (TPU backend assumed)

# ---------------- model hyper-parameters (small test sizes) -----------------
HIDDEN = 32        # hidden_dim
VOCAB = 61         # vocab_size
VOCAB_PAD = 128    # vocab padded to a full 128-lane width for the kernel
NUM_LAYERS = 2
BATCH = 2
SEQ = 8


# --------------------------- fully fused kernel ------------------------------
def fused_lstm_kernel(ids_ref, emb_wih0_ref, b0_ref,
                      w_hh0_ref,
                      w_ih1_ref, w_hh1_ref, b1_ref,
                      w_out_ref, b_out_ref,
                      h0_ref, c0_ref,
                      logits_ref, hn_ref, cn_ref):
    """Embedding + 2-layer LSTM + Linear in one kernel (no grid), time-major rows.

    ids_ref     : (T*B, 1) int32, rows in time-major order (row = t*B + b)
    emb_wih0    : (VOCAB_PAD, 4H)   == embedding_pad @ w_ih_l0 (embedding folded in)
    w_hh*/w_ih1 : (H, 4H)           (transpose of PyTorch layout, gate order i,f,g,o)
    b*          : (1, 4H)           (b_ih + b_hh)
    w_out/b_out : (H, VOCAB_PAD), (1, VOCAB_PAD)
    h0/c0       : (L, B, H)
    outputs     : logits (T*B, VOCAB_PAD) time-major, hn/cn (L, B, H)
    """
    B = h0_ref.shape[1]
    H = h0_ref.shape[2]
    TB = ids_ref.shape[0]
    T = TB // B
    VP = emb_wih0_ref.shape[0]

    # ---- embedding folded into layer-0 input projection (one-hot matmul) ----
    ids = ids_ref[...]                                          # (T*B, 1) int32
    lane = lax.broadcasted_iota(jnp.int32, (TB, VP), 1)
    onehot = (lane == ids).astype(jnp.float32)                  # (T*B, VP)
    xg0 = jnp.dot(onehot, emb_wih0_ref[...],
                  preferred_element_type=jnp.float32) + b0_ref[...]   # (T*B, 4H)

    def cell(pre, h, c, w_hh):
        # Single small matmul on the serial path; whole-vreg sigmoid (1 EUP push).
        gates = pre + jnp.dot(h, w_hh,
                              preferred_element_type=jnp.float32)     # (B, 4H)
        sig = jax.nn.sigmoid(gates)
        i = sig[:, 0 * H:1 * H]
        f = sig[:, 1 * H:2 * H]
        o = sig[:, 3 * H:4 * H]
        g = jnp.tanh(gates[:, 2 * H:3 * H])
        c_new = f * c + i * g
        h_new = o * jnp.tanh(c_new)
        return h_new, c_new

    # ---- layer 0: unrolled recurrence ---------------------------------------
    w_hh0 = w_hh0_ref[...]
    h = h0_ref[0]
    c = c0_ref[0]
    h0_steps = []
    for t in range(T):
        pre = xg0[t * B:(t + 1) * B, :]          # contiguous sublane slice (B, 4H)
        h, c = cell(pre, h, c, w_hh0)
        h0_steps.append(h)
    hn_ref[0] = h
    cn_ref[0] = c

    # layer-1 input projection: ONE batched matmul over the whole sequence
    h0_all = jnp.concatenate(h0_steps, axis=0)                  # (T*B, H)
    xg1 = jnp.dot(h0_all, w_ih1_ref[...],
                  preferred_element_type=jnp.float32) + b1_ref[...]   # (T*B, 4H)

    # ---- layer 1: unrolled recurrence ---------------------------------------
    w_hh1 = w_hh1_ref[...]
    h = h0_ref[1]
    c = c0_ref[1]
    h1_steps = []
    for t in range(T):
        pre = xg1[t * B:(t + 1) * B, :]
        h, c = cell(pre, h, c, w_hh1)
        h1_steps.append(h)
    hn_ref[1] = h
    cn_ref[1] = c

    # ---- output Linear: ONE batched matmul + ONE unmasked lane-dense store --
    h1_all = jnp.concatenate(h1_steps, axis=0)                  # (T*B, H)
    logits_ref[...] = (jnp.dot(h1_all, w_out_ref[...],
                               preferred_element_type=jnp.float32)
                       + b_out_ref[...])                        # (T*B, VP)


# ------------------------------ full forward --------------------------------
@jax.jit
def lstm_encoder_forward(params, ar, h0, c0):
    B, T = ar.shape
    # time-major row order (row = t*B + b); the (B,T) transpose is free host-side.
    ids = ar.T.reshape(T * B, 1).astype(jnp.int32)
    logits_tm, hn, cn = pl.pallas_call(
        fused_lstm_kernel,
        out_shape=(jax.ShapeDtypeStruct((T * B, VOCAB_PAD), jnp.float32),
                   jax.ShapeDtypeStruct((NUM_LAYERS, B, HIDDEN), jnp.float32),
                   jax.ShapeDtypeStruct((NUM_LAYERS, B, HIDDEN), jnp.float32)),
    )(ids, params["emb_wih0_pad"], params["b_l0"],
      params["w_hh_l0"],
      params["w_ih_l1"], params["w_hh_l1"], params["b_l1"],
      params["w_out_pad"], params["b_out_pad"],
      h0, c0)
    # back to PyTorch's batch-first row order (row = b*T + t) and real vocab
    logits = logits_tm.reshape(T, B, VOCAB_PAD).transpose(1, 0, 2)
    logits = logits.reshape(B * T, VOCAB_PAD)[:, :VOCAB]
    return logits, (hn, cn)


# ------------------------- pure-JAX reference check --------------------------
def ref_forward(params, ar, h0, c0):
    x = jnp.take(params["embedding"], ar, axis=0)
    B, T, H = x.shape
    hn_all, cn_all = [], []
    inp = x
    for l in range(NUM_LAYERS):
        w_ih = params[f"w_ih_l{l}"]
        w_hh = params[f"w_hh_l{l}"]
        b = params[f"b_l{l}"][0]
        h, c = h0[l], c0[l]
        outs = []
        for t in range(T):
            g = inp[:, t, :] @ w_ih + h @ w_hh + b
            i = jax.nn.sigmoid(g[:, :H])
            f = jax.nn.sigmoid(g[:, H:2 * H])
            gg = jnp.tanh(g[:, 2 * H:3 * H])
            o = jax.nn.sigmoid(g[:, 3 * H:])
            c = f * c + i * gg
            h = o * jnp.tanh(c)
            outs.append(h)
        inp = jnp.stack(outs, axis=1)
        hn_all.append(h)
        cn_all.append(c)
    y = inp.reshape(-1, H) @ params["w_out"] + params["b_out"]
    return y, (jnp.stack(hn_all), jnp.stack(cn_all))


# ---------------------------- deterministic init -----------------------------
def init_params(key):
    ks = jax.random.split(key, 8)
    scale = 1.0 / jnp.sqrt(HIDDEN)
    emb = jax.random.normal(ks[0], (VOCAB, HIDDEN), jnp.float32)
    w_out = jax.random.uniform(ks[1], (HIDDEN, VOCAB), jnp.float32, -scale, scale)
    b_out = jax.random.uniform(ks[2], (VOCAB,), jnp.float32, -scale, scale)
    params = {
        "embedding": emb,
        "w_out": w_out,
        "b_out": b_out,
        # vocab padded to a full 128-lane width for the fused kernel
        "embedding_pad": jnp.zeros((VOCAB_PAD, HIDDEN), jnp.float32).at[:VOCAB].set(emb),
        "w_out_pad": jnp.zeros((HIDDEN, VOCAB_PAD), jnp.float32).at[:, :VOCAB].set(w_out),
        "b_out_pad": jnp.zeros((1, VOCAB_PAD), jnp.float32).at[0, :VOCAB].set(b_out),
    }
    for l in range(NUM_LAYERS):
        kk = jax.random.split(ks[3 + l], 4)
        hin = HIDDEN  # both layers have input_size == hidden_size
        # stored transposed relative to PyTorch: (in, 4H), gate order (i,f,g,o)
        params[f"w_ih_l{l}"] = jax.random.uniform(
            kk[0], (hin, 4 * HIDDEN), jnp.float32, -scale, scale)
        params[f"w_hh_l{l}"] = jax.random.uniform(
            kk[1], (HIDDEN, 4 * HIDDEN), jnp.float32, -scale, scale)
        b_ih = jax.random.uniform(kk[2], (4 * HIDDEN,), jnp.float32, -scale, scale)
        b_hh = jax.random.uniform(kk[3], (4 * HIDDEN,), jnp.float32, -scale, scale)
        params[f"b_l{l}"] = (b_ih + b_hh).reshape(1, 4 * HIDDEN)
    # embedding folded into layer-0's input projection (zero-padded rows stay zero)
    params["emb_wih0_pad"] = params["embedding_pad"] @ params["w_ih_l0"]   # (VP, 4H)
    return params


if __name__ == "__main__":
    key = jax.random.PRNGKey(0)
    k_par, k_tok = jax.random.split(key)
    params = init_params(k_par)

    # inputs: token ids (B, T) int32, h0/c0 (num_layers, B, H) zeros
    ar = jax.random.randint(k_tok, (BATCH, SEQ), 0, VOCAB, jnp.int32)
    h0 = jnp.zeros((NUM_LAYERS, BATCH, HIDDEN), jnp.float32)
    c0 = jnp.zeros((NUM_LAYERS, BATCH, HIDDEN), jnp.float32)

    logits, (hn, cn) = lstm_encoder_forward(params, ar, h0, c0)
    logits = jax.block_until_ready(logits)
    hn = jax.block_until_ready(hn)
    cn = jax.block_until_ready(cn)

    # sanity check against pure-JAX reference
    ref_logits, (ref_hn, ref_cn) = ref_forward(params, ar, h0, c0)
    assert logits.shape == (BATCH * SEQ, VOCAB)
    assert hn.shape == (NUM_LAYERS, BATCH, HIDDEN)
    assert cn.shape == (NUM_LAYERS, BATCH, HIDDEN)
    assert jnp.allclose(logits, ref_logits, atol=1e-4, rtol=1e-4)
    assert jnp.allclose(hn, ref_hn, atol=1e-4, rtol=1e-4)
    assert jnp.allclose(cn, ref_cn, atol=1e-4, rtol=1e-4)

    print("KERNEL_OK")
</pallas_src>

<mosaic_0001>
module attributes {stable_mosaic.version = 11 : i64} {
  func.func @fused_lstm_kernel(%arg0: memref<16x1xi32, #tpu.memory_space<vmem>>, %arg1: memref<128x128xf32, #tpu.memory_space<vmem>>, %arg2: memref<1x128xf32, #tpu.memory_space<vmem>>, %arg3: memref<32x128xf32, #tpu.memory_space<vmem>>, %arg4: memref<32x128xf32, #tpu.memory_space<vmem>>, %arg5: memref<32x128xf32, #tpu.memory_space<vmem>>, %arg6: memref<1x128xf32, #tpu.memory_space<vmem>>, %arg7: memref<32x128xf32, #tpu.memory_space<vmem>>, %arg8: memref<1x128xf32, #tpu.memory_space<vmem>>, %arg9: memref<2x2x32xf32, #tpu.memory_space<vmem>>, %arg10: memref<2x2x32xf32, #tpu.memory_space<vmem>>, %arg11: memref<16x128xf32, #tpu.memory_space<vmem>>, %arg12: memref<2x2x32xf32, #tpu.memory_space<vmem>>, %arg13: memref<2x2x32xf32, #tpu.memory_space<vmem>>) attributes {dimension_semantics = [], scalar_prefetch = 0 : i64, scratch_operands = 0 : i64, tpu.core_type = #tpu.core_type<tc>} {
    %c0 = arith.constant 0 : index
    %c0_0 = arith.constant 0 : index
    %0 = vector.load %arg0[%c0, %c0_0] : memref<16x1xi32, #tpu.memory_space<vmem>>, vector<16x1xi32>
    %1 = tpu.iota {dimensions = array<i32: 1>} : vector<16x128xi32>
    %2 = vector.broadcast %0 : vector<16x1xi32> to vector<16x128xi32>
    %3 = arith.cmpi eq, %1, %2 : vector<16x128xi32>
    %4 = arith.extui %3 : vector<16x128xi1> to vector<16x128xi32>
    %5 = arith.sitofp %4 : vector<16x128xi32> to vector<16x128xf32>
    %c0_1 = arith.constant 0 : index
    %c0_2 = arith.constant 0 : index
    %6 = vector.load %arg1[%c0_1, %c0_2] : memref<128x128xf32, #tpu.memory_space<vmem>>, vector<128x128xf32>
    %cst = arith.constant dense<0.000000e+00> : vector<16x128xf32>
    %7 = tpu.matmul %5, %6, %cst {dimension_numbers = #tpu.dot_dimension_numbers<[1], [0], [0], [1], [0, 0, 1, 1], [], []>} : vector<16x128xf32>, vector<128x128xf32>, vector<16x128xf32> -> vector<16x128xf32>
    %c0_3 = arith.constant 0 : index
    %c0_4 = arith.constant 0 : index
    %8 = vector.load %arg2[%c0_3, %c0_4] : memref<1x128xf32, #tpu.memory_space<vmem>>, vector<1x128xf32>
    %9 = vector.broadcast %8 : vector<1x128xf32> to vector<16x128xf32>
    %10 = arith.addf %7, %9 : vector<16x128xf32>
    %c0_5 = arith.constant 0 : index
    %c0_6 = arith.constant 0 : index
    %11 = vector.load %arg3[%c0_5, %c0_6] : memref<32x128xf32, #tpu.memory_space<vmem>>, vector<32x128xf32>
    %c0_7 = arith.constant 0 : index
    %c0_8 = arith.constant 0 : index
    %c0_9 = arith.constant 0 : index
    %12 = vector.load %arg9[%c0_7, %c0_8, %c0_9] : memref<2x2x32xf32, #tpu.memory_space<vmem>>, vector<1x2x32xf32>
    %13 = vector.shape_cast %12 : vector<1x2x32xf32> to vector<2x32xf32>
    %c0_10 = arith.constant 0 : index
    %c0_11 = arith.constant 0 : index
    %c0_12 = arith.constant 0 : index
    %14 = vector.load %arg10[%c0_10, %c0_11, %c0_12] : memref<2x2x32xf32, #tpu.memory_space<vmem>>, vector<1x2x32xf32>
    %15 = vector.shape_cast %14 : vector<1x2x32xf32> to vector<2x32xf32>
    %16 = vector.extract_strided_slice %10 {offsets = [0, 0], sizes = [2, 128], strides = [1, 1]} : vector<16x128xf32> to vector<2x128xf32>
    %cst_13 = arith.constant dense<0.000000e+00> : vector<2x128xf32>
    %17 = tpu.matmul %13, %11, %cst_13 {dimension_numbers = #tpu.dot_dimension_numbers<[1], [0], [0], [1], [0, 0, 1, 1], [], []>} : vector<2x32xf32>, vector<32x128xf32>, vector<2x128xf32> -> vector<2x128xf32>
    %18 = arith.addf %16, %17 : vector<2x128xf32>
    %19 = arith.negf %18 : vector<2x128xf32>
    %20 = math.exp %19 : vector<2x128xf32>
    %cst_14 = arith.constant 1.000000e+00 : f32
    %21 = vector.broadcast %cst_14 : f32 to vector<2x128xf32>
    %22 = arith.addf %21, %20 : vector<2x128xf32>
    %23 = arith.divf %21, %22 : vector<2x128xf32>
    %24 = vector.extract_strided_slice %23 {offsets = [0, 0], sizes = [2, 32], strides = [1, 1]} : vector<2x128xf32> to vector<2x32xf32>
    %25 = vector.extract_strided_slice %23 {offsets = [0, 32], sizes = [2, 32], strides = [1, 1]} : vector<2x128xf32> to vector<2x32xf32>
    %26 = vector.extract_strided_slice %23 {offsets = [0, 96], sizes = [2, 32], strides = [1, 1]} : vector<2x128xf32> to vector<2x32xf32>
    %27 = vector.extract_strided_slice %18 {offsets = [0, 64], sizes = [2, 32], strides = [1, 1]} : vector<2x128xf32> to vector<2x32xf32>
    %28 = math.tanh %27 : vector<2x32xf32>
    %29 = arith.mulf %25, %15 : vector<2x32xf32>
    %30 = arith.mulf %24, %28 : vector<2x32xf32>
    %31 = arith.addf %29, %30 : vector<2x32xf32>
    %32 = math.tanh %31 : vector<2x32xf32>
    %33 = arith.mulf %26, %32 : vector<2x32xf32>
    %34 = vector.extract_strided_slice %10 {offsets = [2, 0], sizes = [2, 128], strides = [1, 1]} : vector<16x128xf32> to vector<2x128xf32>
    %cst_15 = arith.constant dense<0.000000e+00> : vector<2x128xf32>
    %35 = tpu.matmul %33, %11, %cst_15 {dimension_numbers = #tpu.dot_dimension_numbers<[1], [0], [0], [1], [0, 0, 1, 1], [], []>} : vector<2x32xf32>, vector<32x128xf32>, vector<2x128xf32> -> vector<2x128xf32>
    %36 = arith.addf %34, %35 : vector<2x128xf32>
    %37 = arith.negf %36 : vector<2x128xf32>
    %38 = math.exp %37 : vector<2x128xf32>
    %cst_16 = arith.constant 1.000000e+00 : f32
    %39 = vector.broadcast %cst_16 : f32 to vector<2x128xf32>
    %40 = arith.addf %39, %38 : vector<2x128xf32>
    %41 = arith.divf %39, %40 : vector<2x128xf32>
    %42 = vector.extract_strided_slice %41 {offsets = [0, 0], sizes = [2, 32], strides = [1, 1]} : vector<2x128xf32> to vector<2x32xf32>
    %43 = vector.extract_strided_slice %41 {offsets = [0, 32], sizes = [2, 32], strides = [1, 1]} : vector<2x128xf32> to vector<2x32xf32>
    %44 = vector.extract_strided_slice %41 {offsets = [0, 96], sizes = [2, 32], strides = [1, 1]} : vector<2x128xf32> to vector<2x32xf32>
    %45 = vector.extract_strided_slice %36 {offsets = [0, 64], sizes = [2, 32], strides = [1, 1]} : vector<2x128xf32> to vector<2x32xf32>
    %46 = math.tanh %45 : vector<2x32xf32>
    %47 = arith.mulf %43, %31 : vector<2x32xf32>
    %48 = arith.mulf %42, %46 : vector<2x32xf32>
    %49 = arith.addf %47, %48 : vector<2x32xf32>
    %50 = math.tanh %49 : vector<2x32xf32>
    %51 = arith.mulf %44, %50 : vector<2x32xf32>
    %52 = vector.extract_strided_slice %10 {offsets = [4, 0], sizes = [2, 128], strides = [1, 1]} : vector<16x128xf32> to vector<2x128xf32>
    %cst_17 = arith.constant dense<0.000000e+00> : vector<2x128xf32>
    %53 = tpu.matmul %51, %11, %cst_17 {dimension_numbers = #tpu.dot_dimension_numbers<[1], [0], [0], [1], [0, 0, 1, 1], [], []>} : vector<2x32xf32>, vector<32x128xf32>, vector<2x128xf32> -> vector<2x128xf32>
    %54 = arith.addf %52, %53 : vector<2x128xf32>
    %55 = arith.negf %54 : vector<2x128xf32>
    %56 = math.exp %55 : vector<2x128xf32>
    %cst_18 = arith.constant 1.000000e+00 : f32
    %57 = vector.broadcast %cst_18 : f32 to vector<2x128xf32>
    %58 = arith.addf %57, %56 : vector<2x128xf32>
    %59 = arith.divf %57, %58 : vector<2x128xf32>
    %60 = vector.extract_strided_slice %59 {offsets = [0, 0], sizes = [2, 32], strides = [1, 1]} : vector<2x128xf32> to vector<2x32xf32>
    %61 = vector.extract_strided_slice %59 {offsets = [0, 32], sizes = [2, 32], strides = [1, 1]} : vector<2x128xf32> to vector<2x32xf32>
    %62 = vector.extract_strided_slice %59 {offsets = [0, 96], sizes = [2, 32], strides = [1, 1]} : vector<2x128xf32> to vector<2x32xf32>
    %63 = vector.extract_strided_slice %54 {offsets = [0, 64], sizes = [2, 32], strides = [1, 1]} : vector<2x128xf32> to vector<2x32xf32>
    %64 = math.tanh %63 : vector<2x32xf32>
    %65 = arith.mulf %61, %49 : vector<2x32xf32>
    %66 = arith.mulf %60, %64 : vector<2x32xf32>
    %67 = arith.addf %65, %66 : vector<2x32xf32>
    %68 = math.tanh %67 : vector<2x32xf32>
    %69 = arith.mulf %62, %68 : vector<2x32xf32>
    %70 = vector.extract_strided_slice %10 {offsets = [6, 0], sizes = [2, 128], strides = [1, 1]} : vector<16x128xf32> to vector<2x128xf32>
    %cst_19 = arith.constant dense<0.000000e+00> : vector<2x128xf32>
    %71 = tpu.matmul %69, %11, %cst_19 {dimension_numbers = #tpu.dot_dimension_numbers<[1], [0], [0], [1], [0, 0, 1, 1], [], []>} : vector<2x32xf32>, vector<32x128xf32>, vector<2x128xf32> -> vector<2x128xf32>
    %72 = arith.addf %70, %71 : vector<2x128xf32>
    %73 = arith.negf %72 : vector<2x128xf32>
    %74 = math.exp %73 : vector<2x128xf32>
    %cst_20 = arith.constant 1.000000e+00 : f32
    %75 = vector.broadcast %cst_20 : f32 to vector<2x128xf32>
    %76 = arith.addf %75, %74 : vector<2x128xf32>
    %77 = arith.divf %75, %76 : vector<2x128xf32>
    %78 = vector.extract_strided_slice %77 {offsets = [0, 0], sizes = [2, 32], strides = [1, 1]} : vector<2x128xf32> to vector<2x32xf32>
    %79 = vector.extract_strided_slice %77 {offsets = [0, 32], sizes = [2, 32], strides = [1, 1]} : vector<2x128xf32> to vector<2x32xf32>
    %80 = vector.extract_strided_slice %77 {offsets = [0, 96], sizes = [2, 32], strides = [1, 1]} : vector<2x128xf32> to vector<2x32xf32>
    %81 = vector.extract_strided_slice %72 {offsets = [0, 64], sizes = [2, 32], strides = [1, 1]} : vector<2x128xf32> to vector<2x32xf32>
    %82 = math.tanh %81 : vector<2x32xf32>
    %83 = arith.mulf %79, %67 : vector<2x32xf32>
    %84 = arith.mulf %78, %82 : vector<2x32xf32>
    %85 = arith.addf %83, %84 : vector<2x32xf32>
    %86 = math.tanh %85 : vector<2x32xf32>
    %87 = arith.mulf %80, %86 : vector<2x32xf32>
    %88 = vector.extract_strided_slice %10 {offsets = [8, 0], sizes = [2, 128], strides = [1, 1]} : vector<16x128xf32> to vector<2x128xf32>
    %cst_21 = arith.constant dense<0.000000e+00> : vector<2x128xf32>
    %89 = tpu.matmul %87, %11, %cst_21 {dimension_numbers = #tpu.dot_dimension_numbers<[1], [0], [0], [1], [0, 0, 1, 1], [], []>} : vector<2x32xf32>, vector<32x128xf32>, vector<2x128xf32> -> vector<2x128xf32>
    %90 = arith.addf %88, %89 : vector<2x128xf32>
    %91 = arith.negf %90 : vector<2x128xf32>
    %92 = math.exp %91 : vector<2x128xf32>
    %cst_22 = arith.constant 1.000000e+00 : f32
    %93 = vector.broadcast %cst_22 : f32 to vector<2x128xf32>
    %94 = arith.addf %93, %92 : vector<2x128xf32>
    %95 = arith.divf %93, %94 : vector<2x128xf32>
    %96 = vector.extract_strided_slice %95 {offsets = [0, 0], sizes = [2, 32], strides = [1, 1]} : vector<2x128xf32> to vector<2x32xf32>
    %97 = vector.extract_strided_slice %95 {offsets = [0, 32], sizes = [2, 32], strides = [1, 1]} : vector<2x128xf32> to vector<2x32xf32>
    %98 = vector.extract_strided_slice %95 {offsets = [0, 96], sizes = [2, 32], strides = [1, 1]} : vector<2x128xf32> to vector<2x32xf32>
    %99 = vector.extract_strided_slice %90 {offsets = [0, 64], sizes = [2, 32], strides = [1, 1]} : vector<2x128xf32> to vector<2x32xf32>
    %100 = math.tanh %99 : vector<2x32xf32>
    %101 = arith.mulf %97, %85 : vector<2x32xf32>
    %102 = arith.mulf %96, %100 : vector<2x32xf32>
    %103 = arith.addf %101, %102 : vector<2x32xf32>
    %104 = math.tanh %103 : vector<2x32xf32>
    %105 = arith.mulf %98, %104 : vector<2x32xf32>
    %106 = vector.extract_strided_slice %10 {offsets = [10, 0], sizes = [2, 128], strides = [1, 1]} : vector<16x128xf32> to vector<2x128xf32>
    %cst_23 = arith.constant dense<0.000000e+00> : vector<2x128xf32>
    %107 = tpu.matmul %105, %11, %cst_23 {dimension_numbers = #tpu.dot_dimension_numbers<[1], [0], [0], [1], [0, 0, 1, 1], [], []>} : vector<2x32xf32>, vector<32x128xf32>, vector<2x128xf32> -> vector<2x128xf32>
    %108 = arith.addf %106, %107 : vector<2x128xf32>
    %109 = arith.negf %108 : vector<2x128xf32>
    %110 = math.exp %109 : vector<2x128xf32>
    %cst_24 = arith.constant 1.000000e+00 : f32
    %111 = vector.broadcast %cst_24 : f32 to vector<2x128xf32>
    %112 = arith.addf %111, %110 : vector<2x128xf32>
    %113 = arith.divf %111, %112 : vector<2x128xf32>
    %114 = vector.extract_strided_slice %113 {offsets = [0, 0], sizes = [2, 32], strides = [1, 1]} : vector<2x128xf32> to vector<2x32xf32>
    %115 = vector.extract_strided_slice %113 {offsets = [0, 32], sizes = [2, 32], strides = [1, 1]} : vector<2x128xf32> to vector<2x32xf32>
    %116 = vector.extract_strided_slice %113 {offsets = [0, 96], sizes = [2, 32], strides = [1, 1]} : vector<2x128xf32> to vector<2x32xf32>
    %117 = vector.extract_strided_slice %108 {offsets = [0, 64], sizes = [2, 32], strides = [1, 1]} : vector<2x128xf32> to vector<2x32xf32>
    %118 = math.tanh %117 : vector<2x32xf32>
    %119 = arith.mulf %115, %103 : vector<2x32xf32>
    %120 = arith.mulf %114, %118 : vector<2x32xf32>
    %121 = arith.addf %119, %120 : vector<2x32xf32>
    %122 = math.tanh %121 : vector<2x32xf32>
    %123 = arith.mulf %116, %122 : vector<2x32xf32>
    %124 = vector.extract_strided_slice %10 {offsets = [12, 0], sizes = [2, 128], strides = [1, 1]} : vector<16x128xf32> to vector<2x128xf32>
    %cst_25 = arith.constant dense<0.000000e+00> : vector<2x128xf32>
    %125 = tpu.matmul %123, %11, %cst_25 {dimension_numbers = #tpu.dot_dimension_numbers<[1], [0], [0], [1], [0, 0, 1, 1], [], []>} : vector<2x32xf32>, vector<32x128xf32>, vector<2x128xf32> -> vector<2x128xf32>
    %126 = arith.addf %124, %125 : vector<2x128xf32>
    %127 = arith.negf %126 : vector<2x128xf32>
    %128 = math.exp %127 : vector<2x128xf32>
    %cst_26 = arith.constant 1.000000e+00 : f32
    %129 = vector.broadcast %cst_26 : f32 to vector<2x128xf32>
    %130 = arith.addf %129, %128 : vector<2x128xf32>
    %131 = arith.divf %129, %130 : vector<2x128xf32>
    %132 = vector.extract_strided_slice %131 {offsets = [0, 0], sizes = [2, 32], strides = [1, 1]} : vector<2x128xf32> to vector<2x32xf32>
    %133 = vector.extract_strided_slice %131 {offsets = [0, 32], sizes = [2, 32], strides = [1, 1]} : vector<2x128xf32> to vector<2x32xf32>
    %134 = vector.extract_strided_slice %131 {offsets = [0, 96], sizes = [2, 32], strides = [1, 1]} : vector<2x128xf32> to vector<2x32xf32>
    %135 = vector.extract_strided_slice %126 {offsets = [0, 64], sizes = [2, 32], strides = [1, 1]} : vector<2x128xf32> to vector<2x32xf32>
    %136 = math.tanh %135 : vector<2x32xf32>
    %137 = arith.mulf %133, %121 : vector<2x32xf32>
    %138 = arith.mulf %132, %136 : vector<2x32xf32>
    %139 = arith.addf %137, %138 : vector<2x32xf32>
    %140 = math.tanh %139 : vector<2x32xf32>
    %141 = arith.mulf %134, %140 : vector<2x32xf32>
    %142 = vector.extract_strided_slice %10 {offsets = [14, 0], sizes = [2, 128], strides = [1, 1]} : vector<16x128xf32> to vector<2x128xf32>
    %cst_27 = arith.constant dense<0.000000e+00> : vector<2x128xf32>
    %143 = tpu.matmul %141, %11, %cst_27 {dimension_numbers = #tpu.dot_dimension_numbers<[1], [0], [0], [1], [0, 0, 1, 1], [], []>} : vector<2x32xf32>, vector<32x128xf32>, vector<2x128xf32> -> vector<2x128xf32>
    %144 = arith.addf %142, %143 : vector<2x128xf32>
    %145 = arith.negf %144 : vector<2x128xf32>
    %146 = math.exp %145 : vector<2x128xf32>
    %cst_28 = arith.constant 1.000000e+00 : f32
    %147 = vector.broadcast %cst_28 : f32 to vector<2x128xf32>
    %148 = arith.addf %147, %146 : vector<2x128xf32>
    %149 = arith.divf %147, %148 : vector<2x128xf32>
    %150 = vector.extract_strided_slice %149 {offsets = [0, 0], sizes = [2, 32], strides = [1, 1]} : vector<2x128xf32> to vector<2x32xf32>
    %151 = vector.extract_strided_slice %149 {offsets = [0, 32], sizes = [2, 32], strides = [1, 1]} : vector<2x128xf32> to vector<2x32xf32>
    %152 = vector.extract_strided_slice %149 {offsets = [0, 96], sizes = [2, 32], strides = [1, 1]} : vector<2x128xf32> to vector<2x32xf32>
    %153 = vector.extract_strided_slice %144 {offsets = [0, 64], sizes = [2, 32], strides = [1, 1]} : vector<2x128xf32> to vector<2x32xf32>
    %154 = math.tanh %153 : vector<2x32xf32>
    %155 = arith.mulf %151, %139 : vector<2x32xf32>
    %156 = arith.mulf %150, %154 : vector<2x32xf32>
    %157 = arith.addf %155, %156 : vector<2x32xf32>
    %158 = math.tanh %157 : vector<2x32xf32>
    %159 = arith.mulf %152, %158 : vector<2x32xf32>
    %c0_29 = arith.constant 0 : index
    %c0_30 = arith.constant 0 : index
    %c0_31 = arith.constant 0 : index
    %160 = vector.load %arg12[%c0_29, %c0_30, %c0_31] : memref<2x2x32xf32, #tpu.memory_space<vmem>>, vector<1x2x32xf32>
    %161 = vector.shape_cast %160 : vector<1x2x32xf32> to vector<2x32xf32>
    %162 = vector.shape_cast %159 : vector<2x32xf32> to vector<1x2x32xf32>
    tpu.vector_store %arg12[%c0_29, %c0_30, %c0_31], %162 {strides = array<i32>} : memref<2x2x32xf32, #tpu.memory_space<vmem>>, vector<1x2x32xf32>,
    %c0_32 = arith.constant 0 : index
    %c0_33 = arith.constant 0 : index
    %c0_34 = arith.constant 0 : index
    %163 = vector.load %arg13[%c0_32, %c0_33, %c0_34] : memref<2x2x32xf32, #tpu.memory_space<vmem>>, vector<1x2x32xf32>
    %164 = vector.shape_cast %163 : vector<1x2x32xf32> to vector<2x32xf32>
    %165 = vector.shape_cast %157 : vector<2x32xf32> to vector<1x2x32xf32>
    tpu.vector_store %arg13[%c0_32, %c0_33, %c0_34], %165 {strides = array<i32>} : memref<2x2x32xf32, #tpu.memory_space<vmem>>, vector<1x2x32xf32>,
    %166 = tpu.concatenate %33, %51, %69, %87, %105, %123, %141, %159 in 0 : vector<2x32xf32>, vector<2x32xf32>, vector<2x32xf32>, vector<2x32xf32>, vector<2x32xf32>, vector<2x32xf32>, vector<2x32xf32>, vector<2x32xf32> -> vector<16x32xf32>
    %c0_35 = arith.constant 0 : index
    %c0_36 = arith.constant 0 : index
    %167 = vector.load %arg4[%c0_35, %c0_36] : memref<32x128xf32, #tpu.memory_space<vmem>>, vector<32x128xf32>
    %cst_37 = arith.constant dense<0.000000e+00> : vector<16x128xf32>
    %168 = tpu.matmul %166, %167, %cst_37 {dimension_numbers = #tpu.dot_dimension_numbers<[1], [0], [0], [1], [0, 0, 1, 1], [], []>} : vector<16x32xf32>, vector<32x128xf32>, vector<16x128xf32> -> vector<16x128xf32>
    %c0_38 = arith.constant 0 : index
    %c0_39 = arith.constant 0 : index
    %169 = vector.load %arg6[%c0_38, %c0_39] : memref<1x128xf32, #tpu.memory_space<vmem>>, vector<1x128xf32>
    %170 = vector.broadcast %169 : vector<1x128xf32> to vector<16x128xf32>
    %171 = arith.addf %168, %170 : vector<16x128xf32>
    %c0_40 = arith.constant 0 : index
    %c0_41 = arith.constant 0 : index
    %172 = vector.load %arg5[%c0_40, %c0_41] : memref<32x128xf32, #tpu.memory_space<vmem>>, vector<32x128xf32>
    %c1 = arith.constant 1 : index
    %c0_42 = arith.constant 0 : index
    %c0_43 = arith.constant 0 : index
    %173 = vector.load %arg9[%c1, %c0_42, %c0_43] : memref<2x2x32xf32, #tpu.memory_space<vmem>>, vector<1x2x32xf32>
    %174 = vector.shape_cast %173 : vector<1x2x32xf32> to vector<2x32xf32>
    %c1_44 = arith.constant 1 : index
    %c0_45 = arith.constant 0 : index
    %c0_46 = arith.constant 0 : index
    %175 = vector.load %arg10[%c1_44, %c0_45, %c0_46] : memref<2x2x32xf32, #tpu.memory_space<vmem>>, vector<1x2x32xf32>
    %176 = vector.shape_cast %175 : vector<1x2x32xf32> to vector<2x32xf32>
    %177 = vector.extract_strided_slice %171 {offsets = [0, 0], sizes = [2, 128], strides = [1, 1]} : vector<16x128xf32> to vector<2x128xf32>
    %cst_47 = arith.constant dense<0.000000e+00> : vector<2x128xf32>
    %178 = tpu.matmul %174, %172, %cst_47 {dimension_numbers = #tpu.dot_dimension_numbers<[1], [0], [0], [1], [0, 0, 1, 1], [], []>} : vector<2x32xf32>, vector<32x128xf32>, vector<2x128xf32> -> vector<2x128xf32>
    %179 = arith.addf %177, %178 : vector<2x128xf32>
    %180 = arith.negf %179 : vector<2x128xf32>
    %181 = math.exp %180 : vector<2x128xf32>
    %cst_48 = arith.constant 1.000000e+00 : f32
    %182 = vector.broadcast %cst_48 : f32 to vector<2x128xf32>
    %183 = arith.addf %182, %181 : vector<2x128xf32>
    %184 = arith.divf %182, %183 : vector<2x128xf32>
    %185 = vector.extract_strided_slice %184 {offsets = [0, 0], sizes = [2, 32], strides = [1, 1]} : vector<2x128xf32> to vector<2x32xf32>
    %186 = vector.extract_strided_slice %184 {offsets = [0, 32], sizes = [2, 32], strides = [1, 1]} : vector<2x128xf32> to vector<2x32xf32>
    %187 = vector.extract_strided_slice %184 {offsets = [0, 96], sizes = [2, 32], strides = [1, 1]} : vector<2x128xf32> to vector<2x32xf32>
    %188 = vector.extract_strided_slice %179 {offsets = [0, 64], sizes = [2, 32], strides = [1, 1]} : vector<2x128xf32> to vector<2x32xf32>
    %189 = math.tanh %188 : vector<2x32xf32>
    %190 = arith.mulf %186, %176 : vector<2x32xf32>
    %191 = arith.mulf %185, %189 : vector<2x32xf32>
    %192 = arith.addf %190, %191 : vector<2x32xf32>
    %193 = math.tanh %192 : vector<2x32xf32>
    %194 = arith.mulf %187, %193 : vector<2x32xf32>
    %195 = vector.extract_strided_slice %171 {offsets = [2, 0], sizes = [2, 128], strides = [1, 1]} : vector<16x128xf32> to vector<2x128xf32>
    %cst_49 = arith.constant dense<0.000000e+00> : vector<2x128xf32>
    %196 = tpu.matmul %194, %172, %cst_49 {dimension_numbers = #tpu.dot_dimension_numbers<[1], [0], [0], [1], [0, 0, 1, 1], [], []>} : vector<2x32xf32>, vector<32x128xf32>, vector<2x128xf32> -> vector<2x128xf32>
    %197 = arith.addf %195, %196 : vector<2x128xf32>
    %198 = arith.negf %197 : vector<2x128xf32>
    %199 = math.exp %198 : vector<2x128xf32>
    %cst_50 = arith.constant 1.000000e+00 : f32
    %200 = vector.broadcast %cst_50 : f32 to vector<2x128xf32>
    %201 = arith.addf %200, %199 : vector<2x128xf32>
    %202 = arith.divf %200, %201 : vector<2x128xf32>
    %203 = vector.extract_strided_slice %202 {offsets = [0, 0], sizes = [2, 32], strides = [1, 1]} : vector<2x128xf32> to vector<2x32xf32>
    %204 = vector.extract_strided_slice %202 {offsets = [0, 32], sizes = [2, 32], strides = [1, 1]} : vector<2x128xf32> to vector<2x32xf32>
    %205 = vector.extract_strided_slice %202 {offsets = [0, 96], sizes = [2, 32], strides = [1, 1]} : vector<2x128xf32> to vector<2x32xf32>
    %206 = vector.extract_strided_slice %197 {offsets = [0, 64], sizes = [2, 32], strides = [1, 1]} : vector<2x128xf32> to vector<2x32xf32>
    %207 = math.tanh %206 : vector<2x32xf32>
    %208 = arith.mulf %204, %192 : vector<2x32xf32>
    %209 = arith.mulf %203, %207 : vector<2x32xf32>
    %210 = arith.addf %208, %209 : vector<2x32xf32>
    %211 = math.tanh %210 : vector<2x32xf32>
    %212 = arith.mulf %205, %211 : vector<2x32xf32>
    %213 = vector.extract_strided_slice %171 {offsets = [4, 0], sizes = [2, 128], strides = [1, 1]} : vector<16x128xf32> to vector<2x128xf32>
    %cst_51 = arith.constant dense<0.000000e+00> : vector<2x128xf32>
    %214 = tpu.matmul %212, %172, %cst_51 {dimension_numbers = #tpu.dot_dimension_numbers<[1], [0], [0], [1], [0, 0, 1, 1], [], []>} : vector<2x32xf32>, vector<32x128xf32>, vector<2x128xf32> -> vector<2x128xf32>
    %215 = arith.addf %213, %214 : vector<2x128xf32>
    %216 = arith.negf %215 : vector<2x128xf32>
    %217 = math.exp %216 : vector<2x128xf32>
    %cst_52 = arith.constant 1.000000e+00 : f32
    %218 = vector.broadcast %cst_52 : f32 to vector<2x128xf32>
    %219 = arith.addf %218, %217 : vector<2x128xf32>
    %220 = arith.divf %218, %219 : vector<2x128xf32>
    %221 = vector.extract_strided_slice %220 {offsets = [0, 0], sizes = [2, 32], strides = [1, 1]} : vector<2x128xf32> to vector<2x32xf32>
    %222 = vector.extract_strided_slice %220 {offsets = [0, 32], sizes = [2, 32], strides = [1, 1]} : vector<2x128xf32> to vector<2x32xf32>
    %223 = vector.extract_strided_slice %220 {offsets = [0, 96], sizes = [2, 32], strides = [1, 1]} : vector<2x128xf32> to vector<2x32xf32>
    %224 = vector.extract_strided_slice %215 {offsets = [0, 64], sizes = [2, 32], strides = [1, 1]} : vector<2x128xf32> to vector<2x32xf32>
    %225 = math.tanh %224 : vector<2x32xf32>
    %226 = arith.mulf %222, %210 : vector<2x32xf32>
    %227 = arith.mulf %221, %225 : vector<2x32xf32>
    %228 = arith.addf %226, %227 : vector<2x32xf32>
    %229 = math.tanh %228 : vector<2x32xf32>
    %230 = arith.mulf %223, %229 : vector<2x32xf32>
    %231 = vector.extract_strided_slice %171 {offsets = [6, 0], sizes = [2, 128], strides = [1, 1]} : vector<16x128xf32> to vector<2x128xf32>
    %cst_53 = arith.constant dense<0.000000e+00> : vector<2x128xf32>
    %232 = tpu.matmul %230, %172, %cst_53 {dimension_numbers = #tpu.dot_dimension_numbers<[1], [0], [0], [1], [0, 0, 1, 1], [], []>} : vector<2x32xf32>, vector<32x128xf32>, vector<2x128xf32> -> vector<2x128xf32>
    %233 = arith.addf %231, %232 : vector<2x128xf32>
    %234 = arith.negf %233 : vector<2x128xf32>
    %235 = math.exp %234 : vector<2x128xf32>
    %cst_54 = arith.constant 1.000000e+00 : f32
    %236 = vector.broadcast %cst_54 : f32 to vector<2x128xf32>
    %237 = arith.addf %236, %235 : vector<2x128xf32>
    %238 = arith.divf %236, %237 : vector<2x128xf32>
    %239 = vector.extract_strided_slice %238 {offsets = [0, 0], sizes = [2, 32], strides = [1, 1]} : vector<2x128xf32> to vector<2x32xf32>
    %240 = vector.extract_strided_slice %238 {offsets = [0, 32], sizes = [2, 32], strides = [1, 1]} : vector<2x128xf32> to vector<2x32xf32>
    %241 = vector.extract_strided_slice %238 {offsets = [0, 96], sizes = [2, 32], strides = [1, 1]} : vector<2x128xf32> to vector<2x32xf32>
    %242 = vector.extract_strided_slice %233 {offsets = [0, 64], sizes = [2, 32], strides = [1, 1]} : vector<2x128xf32> to vector<2x32xf32>
    %243 = math.tanh %242 : vector<2x32xf32>
    %244 = arith.mulf %240, %228 : vector<2x32xf32>
    %245 = arith.mulf %239, %243 : vector<2x32xf32>
    %246 = arith.addf %244, %245 : vector<2x32xf32>
    %247 = math.tanh %246 : vector<2x32xf32>
    %248 = arith.mulf %241, %247 : vector<2x32xf32>
    %249 = vector.extract_strided_slice %171 {offsets = [8, 0], sizes = [2, 128], strides = [1, 1]} : vector<16x128xf32> to vector<2x128xf32>
    %cst_55 = arith.constant dense<0.000000e+00> : vector<2x128xf32>
    %250 = tpu.matmul %248, %172, %cst_55 {dimension_numbers = #tpu.dot_dimension_numbers<[1], [0], [0], [1], [0, 0, 1, 1], [], []>} : vector<2x32xf32>, vector<32x128xf32>, vector<2x128xf32> -> vector<2x128xf32>
    %251 = arith.addf %249, %250 : vector<2x128xf32>
    %252 = arith.negf %251 : vector<2x128xf32>
    %253 = math.exp %252 : vector<2x128xf32>
    %cst_56 = arith.constant 1.000000e+00 : f32
    %254 = vector.broadcast %cst_56 : f32 to vector<2x128xf32>
    %255 = arith.addf %254, %253 : vector<2x128xf32>
    %256 = arith.divf %254, %255 : vector<2x128xf32>
    %257 = vector.extract_strided_slice %256 {offsets = [0, 0], sizes = [2, 32], strides = [1, 1]} : vector<2x128xf32> to vector<2x32xf32>
    %258 = vector.extract_strided_slice %256 {offsets = [0, 32], sizes = [2, 32], strides = [1, 1]} : vector<2x128xf32> to vector<2x32xf32>
    %259 = vector.extract_strided_slice %256 {offsets = [0, 96], sizes = [2, 32], strides = [1, 1]} : vector<2x128xf32> to vector<2x32xf32>
    %260 = vector.extract_strided_slice %251 {offsets = [0, 64], sizes = [2, 32], strides = [1, 1]} : vector<2x128xf32> to vector<2x32xf32>
    %261 = math.tanh %260 : vector<2x32xf32>
    %262 = arith.mulf %258, %246 : vector<2x32xf32>
    %263 = arith.mulf %257, %261 : vector<2x32xf32>
    %264 = arith.addf %262, %263 : vector<2x32xf32>
    %265 = math.tanh %264 : vector<2x32xf32>
    %266 = arith.mulf %259, %265 : vector<2x32xf32>
    %267 = vector.extract_strided_slice %171 {offsets = [10, 0], sizes = [2, 128], strides = [1, 1]} : vector<16x128xf32> to vector<2x128xf32>
    %cst_57 = arith.constant dense<0.000000e+00> : vector<2x128xf32>
    %268 = tpu.matmul %266, %172, %cst_57 {dimension_numbers = #tpu.dot_dimension_numbers<[1], [0], [0], [1], [0, 0, 1, 1], [], []>} : vector<2x32xf32>, vector<32x128xf32>, vector<2x128xf32> -> vector<2x128xf32>
    %269 = arith.addf %267, %268 : vector<2x128xf32>
    %270 = arith.negf %269 : vector<2x128xf32>
    %271 = math.exp %270 : vector<2x128xf32>
    %cst_58 = arith.constant 1.000000e+00 : f32
    %272 = vector.broadcast %cst_58 : f32 to vector<2x128xf32>
    %273 = arith.addf %272, %271 : vector<2x128xf32>
    %274 = arith.divf %272, %273 : vector<2x128xf32>
    %275 = vector.extract_strided_slice %274 {offsets = [0, 0], sizes = [2, 32], strides = [1, 1]} : vector<2x128xf32> to vector<2x32xf32>
    %276 = vector.extract_strided_slice %274 {offsets = [0, 32], sizes = [2, 32], strides = [1, 1]} : vector<2x128xf32> to vector<2x32xf32>
    %277 = vector.extract_strided_slice %274 {offsets = [0, 96], sizes = [2, 32], strides = [1, 1]} : vector<2x128xf32> to vector<2x32xf32>
    %278 = vector.extract_strided_slice %269 {offsets = [0, 64], sizes = [2, 32], strides = [1, 1]} : vector<2x128xf32> to vector<2x32xf32>
    %279 = math.tanh %278 : vector<2x32xf32>
    %280 = arith.mulf %276, %264 : vector<2x32xf32>
    %281 = arith.mulf %275, %279 : vector<2x32xf32>
    %282 = arith.addf %280, %281 : vector<2x32xf32>
    %283 = math.tanh %282 : vector<2x32xf32>
    %284 = arith.mulf %277, %283 : vector<2x32xf32>
    %285 = vector.extract_strided_slice %171 {offsets = [12, 0], sizes = [2, 128], strides = [1, 1]} : vector<16x128xf32> to vector<2x128xf32>
    %cst_59 = arith.constant dense<0.000000e+00> : vector<2x128xf32>
    %286 = tpu.matmul %284, %172, %cst_59 {dimension_numbers = #tpu.dot_dimension_numbers<[1], [0], [0], [1], [0, 0, 1, 1], [], []>} : vector<2x32xf32>, vector<32x128xf32>, vector<2x128xf32> -> vector<2x128xf32>
    %287 = arith.addf %285, %286 : vector<2x128xf32>
    %288 = arith.negf %287 : vector<2x128xf32>
    %289 = math.exp %288 : vector<2x128xf32>
    %cst_60 = arith.constant 1.000000e+00 : f32
    %290 = vector.broadcast %cst_60 : f32 to vector<2x128xf32>
    %291 = arith.addf %290, %289 : vector<2x128xf32>
    %292 = arith.divf %290, %291 : vector<2x128xf32>
    %293 = vector.extract_strided_slice %292 {offsets = [0, 0], sizes = [2, 32], strides = [1, 1]} : vector<2x128xf32> to vector<2x32xf32>
    %294 = vector.extract_strided_slice %292 {offsets = [0, 32], sizes = [2, 32], strides = [1, 1]} : vector<2x128xf32> to vector<2x32xf32>
    %295 = vector.extract_strided_slice %292 {offsets = [0, 96], sizes = [2, 32], strides = [1, 1]} : vector<2x128xf32> to vector<2x32xf32>
    %296 = vector.extract_strided_slice %287 {offsets = [0, 64], sizes = [2, 32], strides = [1, 1]} : vector<2x128xf32> to vector<2x32xf32>
    %297 = math.tanh %296 : vector<2x32xf32>
    %298 = arith.mulf %294, %282 : vector<2x32xf32>
    %299 = arith.mulf %293, %297 : vector<2x32xf32>
    %300 = arith.addf %298, %299 : vector<2x32xf32>
    %301 = math.tanh %300 : vector<2x32xf32>
    %302 = arith.mulf %295, %301 : vector<2x32xf32>
    %303 = vector.extract_strided_slice %171 {offsets = [14, 0], sizes = [2, 128], strides = [1, 1]} : vector<16x128xf32> to vector<2x128xf32>
    %cst_61 = arith.constant dense<0.000000e+00> : vector<2x128xf32>
    %304 = tpu.matmul %302, %172, %cst_61 {dimension_numbers = #tpu.dot_dimension_numbers<[1], [0], [0], [1], [0, 0, 1, 1], [], []>} : vector<2x32xf32>, vector<32x128xf32>, vector<2x128xf32> -> vector<2x128xf32>
    %305 = arith.addf %303, %304 : vector<2x128xf32>
    %306 = arith.negf %305 : vector<2x128xf32>
    %307 = math.exp %306 : vector<2x128xf32>
    %cst_62 = arith.constant 1.000000e+00 : f32
    %308 = vector.broadcast %cst_62 : f32 to vector<2x128xf32>
    %309 = arith.addf %308, %307 : vector<2x128xf32>
    %310 = arith.divf %308, %309 : vector<2x128xf32>
    %311 = vector.extract_strided_slice %310 {offsets = [0, 0], sizes = [2, 32], strides = [1, 1]} : vector<2x128xf32> to vector<2x32xf32>
    %312 = vector.extract_strided_slice %310 {offsets = [0, 32], sizes = [2, 32], strides = [1, 1]} : vector<2x128xf32> to vector<2x32xf32>
    %313 = vector.extract_strided_slice %310 {offsets = [0, 96], sizes = [2, 32], strides = [1, 1]} : vector<2x128xf32> to vector<2x32xf32>
    %314 = vector.extract_strided_slice %305 {offsets = [0, 64], sizes = [2, 32], strides = [1, 1]} : vector<2x128xf32> to vector<2x32xf32>
    %315 = math.tanh %314 : vector<2x32xf32>
    %316 = arith.mulf %312, %300 : vector<2x32xf32>
    %317 = arith.mulf %311, %315 : vector<2x32xf32>
    %318 = arith.addf %316, %317 : vector<2x32xf32>
    %319 = math.tanh %318 : vector<2x32xf32>
    %320 = arith.mulf %313, %319 : vector<2x32xf32>
    %c1_63 = arith.constant 1 : index
    %c0_64 = arith.constant 0 : index
    %c0_65 = arith.constant 0 : index
    %321 = vector.load %arg12[%c1_63, %c0_64, %c0_65] : memref<2x2x32xf32, #tpu.memory_space<vmem>>, vector<1x2x32xf32>
    %322 = vector.shape_cast %321 : vector<1x2x32xf32> to vector<2x32xf32>
    %323 = vector.shape_cast %320 : vector<2x32xf32> to vector<1x2x32xf32>
    tpu.vector_store %arg12[%c1_63, %c0_64, %c0_65], %323 {strides = array<i32>} : memref<2x2x32xf32, #tpu.memory_space<vmem>>, vector<1x2x32xf32>,
    %c1_66 = arith.constant 1 : index
    %c0_67 = arith.constant 0 : index
    %c0_68 = arith.constant 0 : index
    %324 = vector.load %arg13[%c1_66, %c0_67, %c0_68] : memref<2x2x32xf32, #tpu.memory_space<vmem>>, vector<1x2x32xf32>
    %325 = vector.shape_cast %324 : vector<1x2x32xf32> to vector<2x32xf32>
    %326 = vector.shape_cast %318 : vector<2x32xf32> to vector<1x2x32xf32>
    tpu.vector_store %arg13[%c1_66, %c0_67, %c0_68], %326 {strides = array<i32>} : memref<2x2x32xf32, #tpu.memory_space<vmem>>, vector<1x2x32xf32>,
    %327 = tpu.concatenate %194, %212, %230, %248, %266, %284, %302, %320 in 0 : vector<2x32xf32>, vector<2x32xf32>, vector<2x32xf32>, vector<2x32xf32>, vector<2x32xf32>, vector<2x32xf32>, vector<2x32xf32>, vector<2x32xf32> -> vector<16x32xf32>
    %c0_69 = arith.constant 0 : index
    %c0_70 = arith.constant 0 : index
    %328 = vector.load %arg7[%c0_69, %c0_70] : memref<32x128xf32, #tpu.memory_space<vmem>>, vector<32x128xf32>
    %cst_71 = arith.constant dense<0.000000e+00> : vector<16x128xf32>
    %329 = tpu.matmul %327, %328, %cst_71 {dimension_numbers = #tpu.dot_dimension_numbers<[1], [0], [0], [1], [0, 0, 1, 1], [], []>} : vector<16x32xf32>, vector<32x128xf32>, vector<16x128xf32> -> vector<16x128xf32>
    %c0_72 = arith.constant 0 : index
    %c0_73 = arith.constant 0 : index
    %330 = vector.load %arg8[%c0_72, %c0_73] : memref<1x128xf32, #tpu.memory_space<vmem>>, vector<1x128xf32>
    %331 = vector.broadcast %330 : vector<1x128xf32> to vector<16x128xf32>
    %332 = arith.addf %329, %331 : vector<16x128xf32>
    %c0_74 = arith.constant 0 : index
    %c0_75 = arith.constant 0 : index
    %333 = vector.load %arg11[%c0_74, %c0_75] : memref<16x128xf32, #tpu.memory_space<vmem>>, vector<16x128xf32>
    tpu.vector_store %arg11[%c0_74, %c0_75], %332 {strides = array<i32>} : memref<16x128xf32, #tpu.memory_space<vmem>>, vector<16x128xf32>,
    return
  }
}

</mosaic_0001>

<llo_original>
// kernel: lstm_encoder_forward.1
$region0: #{lstm_encoder_forward.1}
  #allocation0 [shape = 'u32[]', space=smem, size = 0x4, offset = 0x4, fixed_abs, tag = 'smem constant byte address 0x4 - core index']
  #allocation1 [shape = 'u32[144,128]{1,0:T(1,128)}', space=vmem, size = 0x12000, scoped, tag = 'internal scratch']
  %s0 = inlined_call_operand.vmem [shape: s32[16,1], index: 0, kind: input, shape index: {}]
  %s1 = inlined_call_operand.hbm [shape: f32[128,128], index: 1, kind: input, shape index: {}]
  %s2 = inlined_call_operand.hbm [shape: f32[1,128], index: 2, kind: input, shape index: {}]
  %s3 = inlined_call_operand.vmem [shape: f32[32,128], index: 3, kind: input, shape index: {}]
  %s4 = inlined_call_operand.hbm [shape: f32[32,128], index: 4, kind: input, shape index: {}]
  %s5 = inlined_call_operand.hbm [shape: f32[32,128], index: 5, kind: input, shape index: {}]
  %s6 = inlined_call_operand.hbm [shape: f32[1,128], index: 6, kind: input, shape index: {}]
  %s7 = inlined_call_operand.vmem [shape: f32[32,128], index: 7, kind: input, shape index: {}]
  %s8 = inlined_call_operand.hbm [shape: f32[1,128], index: 8, kind: input, shape index: {}]
  %s9 = inlined_call_operand.vmem [shape: f32[2,2,32], index: 9, kind: input, shape index: {}]
  %s10 = inlined_call_operand.vmem [shape: f32[2,2,32], index: 10, kind: input, shape index: {}]
  %s11 = inlined_call_operand.vmem [shape: f32[16,128], index: 11, kind: output, shape index: {0}]
  %s12 = inlined_call_operand.hbm [shape: f32[2,2,32], index: 12, kind: output, shape index: {1}]
  %s13 = inlined_call_operand.hbm [shape: f32[2,2,32], index: 13, kind: output, shape index: {2}]
  %14 = xla_tuple %s11, %s12, %s13
  %s15 = sld [smem:[#allocation0]]
  $region94: #{lstm_encoder_forward.1} parent=0
    _
  %s17 = ssub.s32 1, %s15
  %s18 = scalar_select 0, %s17, %s15
  $region1: #{lstm_encoder_forward.1} parent=0
    #allocation2 [shape = 'u8[65536]{0}', space=vmem, size = 0x10000, scoped, tag = 'input window, operand 1, single buffered']
    #allocation3 [shape = 's32[1]{0}', space=sflag, size = 0x4, scoped, tag = 'scoped memory for lstm_encoder_forward.1']
    #allocation4 [shape = 's32[1]{0}', space=sflag, size = 0x4, scoped, tag = 'scoped memory for lstm_encoder_forward.1']
    #allocation5 [shape = 'u8[512]{0}', space=vmem, size = 0x400, scoped, tag = 'input window, operand 2, single buffered']
    #allocation6 [shape = 's32[1]{0}', space=sflag, size = 0x4, scoped, tag = 'scoped memory for lstm_encoder_forward.1']
    #allocation7 [shape = 'u8[16384]{0}', space=vmem, size = 0x4000, scoped, tag = 'input window, operand 4, single buffered']
    #allocation8 [shape = 'u8[16384]{0}', space=vmem, size = 0x4000, scoped, tag = 'input window, operand 5, single buffered']
    #allocation9 [shape = 's32[1]{0}', space=sflag, size = 0x4, scoped, tag = 'scoped memory for lstm_encoder_forward.1']
    #allocation10 [shape = 'u8[512]{0}', space=vmem, size = 0x400, scoped, tag = 'input window, operand 6, single buffered']
    #allocation11 [shape = 'u8[512]{0}', space=vmem, size = 0x400, scoped, tag = 'input window, operand 8, single buffered']
    #allocation12 [shape = 's32[1]{0}', space=sflag, size = 0x4, scoped, tag = 'scoped memory for lstm_encoder_forward.1']
    #allocation13 [shape = 'u8[2048]{0}', space=vmem, size = 0x800, scoped, tag = 'output window, operand 1, single buffered']
    #allocation14 [shape = 'u8[2048]{0}', space=vmem, size = 0x800, scoped, tag = 'output window, operand 2, single buffered']
    #allocation15 [shape = 's32[1]{0}', space=sflag, size = 0x4, scoped, tag = 'scoped memory for lstm_encoder_forward.1']
    %19 = vsyncpa [#allocation3], 0
    %20 = vsyncpa [#allocation6], 0
    %21 = vsyncpa [#allocation9], 0
    %22 = vsyncpa [#allocation12], 0
    %23 = vsyncpa [#allocation4], 0
    %24 = vsyncpa [#allocation15], 0
    // Predicated region
    $region2: #{lstm_encoder_forward.1} parent=1 // pred_check
      _
    $region3: #{lstm_encoder_forward.1} parent=1 // pred_check_branch
      %26 = sbr.rel (0) target = $region5
    $region4: #{lstm_encoder_forward.1} parent=1 // pred_region
      _
    $region5: #{lstm_encoder_forward.1} parent=1 // pred_fallthru
      _
    // Predicated region
    $region6: #{lstm_encoder_forward.1} parent=1 // pred_check
      _
    $region7: #{lstm_encoder_forward.1} parent=1 // pred_check_branch
      %28 = sbr.rel (0) target = $region9
    $region8: #{lstm_encoder_forward.1} parent=1 // pred_region
      %s30 = ssub.s32 2048, 2048
      %31 = vsyncadd [#allocation3], %s30
      %s32 = sshll.u32 [#allocation2], 4
      %s33 = int_to_ptr.vmem [resolvable:$true] %s32
      %38 = dma.hbm_to_vmem [thread:$0]  %s1, 2048, %s33, [#allocation3], 128, 128, 8
    $region9: #{lstm_encoder_forward.1} parent=1 // pred_fallthru
      _
    // Predicated region
    $region10: #{lstm_encoder_forward.1} parent=1 // pred_check
      _
    $region11: #{lstm_encoder_forward.1} parent=1 // pred_check_branch
      %40 = sbr.rel (0) target = $region13
    $region12: #{lstm_encoder_forward.1} parent=1 // pred_region
      %s42 = ssub.s32 16, 16
      %43 = vsyncadd [#allocation6], %s42
      %s45 = sshll.u32 [#allocation5], 4
      %s46 = int_to_ptr.vmem [resolvable:$true] %s45
      %48 = dma.hbm_to_vmem [thread:$0]  %s2, 16, %s46, [#allocation6]
    $region13: #{lstm_encoder_forward.1} parent=1 // pred_fallthru
      _
    // Predicated region
    $region14: #{lstm_encoder_forward.1} parent=1 // pred_check
      _
    $region15: #{lstm_encoder_forward.1} parent=1 // pred_check_branch
      %50 = sbr.rel (0) target = $region17
    $region16: #{lstm_encoder_forward.1} parent=1 // pred_region
      _
    $region17: #{lstm_encoder_forward.1} parent=1 // pred_fallthru
      _
    // Predicated region
    $region18: #{lstm_encoder_forward.1} parent=1 // pred_check
      _
    $region19: #{lstm_encoder_forward.1} parent=1 // pred_check_branch
      %52 = sbr.rel (0) target = $region21
    $region20: #{lstm_encoder_forward.1} parent=1 // pred_region
      %s54 = ssub.s32 512, 512
      %55 = vsyncadd [#allocation6], %s54
      %s56 = sshll.u32 [#allocation7], 4
      %s57 = int_to_ptr.vmem [resolvable:$true] %s56
      %62 = dma.hbm_to_vmem [thread:$0]  %s4, 512, %s57, [#allocation6], 128, 128, 8
    $region21: #{lstm_encoder_forward.1} parent=1 // pred_fallthru
      _
    // Predicated region
    $region22: #{lstm_encoder_forward.1} parent=1 // pred_check
      _
    $region23: #{lstm_encoder_forward.1} parent=1 // pred_check_branch
      %64 = sbr.rel (0) target = $region25
    $region24: #{lstm_encoder_forward.1} parent=1 // pred_region
      %s66 = ssub.s32 512, 512
      %67 = vsyncadd [#allocation9], %s66
      %s68 = sshll.u32 [#allocation8], 4
      %s69 = int_to_ptr.vmem [resolvable:$true] %s68
      %74 = dma.hbm_to_vmem [thread:$0]  %s5, 512, %s69, [#allocation9], 128, 128, 8
    $region25: #{lstm_encoder_forward.1} parent=1 // pred_fallthru
      _
    // Predicated region
    $region26: #{lstm_encoder_forward.1} parent=1 // pred_check
      _
    $region27: #{lstm_encoder_forward.1} parent=1 // pred_check_branch
      %76 = sbr.rel (0) target = $region29
    $region28: #{lstm_encoder_forward.1} parent=1 // pred_region
      %s78 = ssub.s32 16, 16
      %79 = vsyncadd [#allocation9], %s78
      %s81 = sshll.u32 [#allocation10], 4
      %s82 = int_to_ptr.vmem [resolvable:$true] %s81
      %84 = dma.hbm_to_vmem [thread:$0]  %s6, 16, %s82, [#allocation9]
    $region29: #{lstm_encoder_forward.1} parent=1 // pred_fallthru
      _
    // Predicated region
    $region30: #{lstm_encoder_forward.1} parent=1 // pred_check
      _
    $region31: #{lstm_encoder_forward.1} parent=1 // pred_check_branch
      %86 = sbr.rel (0) target = $region33
    $region32: #{lstm_encoder_forward.1} parent=1 // pred_region
      _
    $region33: #{lstm_encoder_forward.1} parent=1 // pred_fallthru
      _
    // Predicated region
    $region34: #{lstm_encoder_forward.1} parent=1 // pred_check
      _
    $region35: #{lstm_encoder_forward.1} parent=1 // pred_check_branch
      %88 = sbr.rel (0) target = $region37
    $region36: #{lstm_encoder_forward.1} parent=1 // pred_region
      %s90 = ssub.s32 16, 16
      %91 = vsyncadd [#allocation12], %s90
      %s93 = sshll.u32 [#allocation11], 4
      %s94 = int_to_ptr.vmem [resolvable:$true] %s93
      %96 = dma.hbm_to_vmem [thread:$0]  %s8, 16, %s94, [#allocation12]
    $region37: #{lstm_encoder_forward.1} parent=1 // pred_fallthru
      _
    // Predicated region
    $region38: #{lstm_encoder_forward.1} parent=1 // pred_check
      _
    $region39: #{lstm_encoder_forward.1} parent=1 // pred_check_branch
      %98 = sbr.rel (0) target = $region41
    $region40: #{lstm_encoder_forward.1} parent=1 // pred_region
      _
    $region41: #{lstm_encoder_forward.1} parent=1 // pred_fallthru
      _
    // Predicated region
    $region42: #{lstm_encoder_forward.1} parent=1 // pred_check
      _
    $region43: #{lstm_encoder_forward.1} parent=1 // pred_check_branch
      %100 = sbr.rel (0) target = $region45
    $region44: #{lstm_encoder_forward.1} parent=1 // pred_region
      _
    $region45: #{lstm_encoder_forward.1} parent=1 // pred_fallthru
      _
    // Predicated region
    $region46: #{lstm_encoder_forward.1} parent=1 // pred_check
      _
    $region47: #{lstm_encoder_forward.1} parent=1 // pred_check_branch
      %102 = sbr.rel (0) target = $region49
    $region48: #{lstm_encoder_forward.1} parent=1 // pred_region
      %103 = dma.done [#allocation3], 2048
    $region49: #{lstm_encoder_forward.1} parent=1 // pred_fallthru
      _
    // Predicated region
    $region50: #{lstm_encoder_forward.1} parent=1 // pred_check
      _
    $region51: #{lstm_encoder_forward.1} parent=1 // pred_check_branch
      %105 = sbr.rel (0) target = $region53
    $region52: #{lstm_encoder_forward.1} parent=1 // pred_region
      %106 = dma.done [#allocation6], 16
    $region53: #{lstm_encoder_forward.1} parent=1 // pred_fallthru
      _
    // Predicated region
    $region54: #{lstm_encoder_forward.1} parent=1 // pred_check
      _
    $region55: #{lstm_encoder_forward.1} parent=1 // pred_check_branch
      %108 = sbr.rel (0) target = $region57
    $region56: #{lstm_encoder_forward.1} parent=1 // pred_region
      %109 = dma.done [#allocation6], 512
    $region57: #{lstm_encoder_forward.1} parent=1 // pred_fallthru
      _
    // Predicated region
    $region58: #{lstm_encoder_forward.1} parent=1 // pred_check
      _
    $region59: #{lstm_encoder_forward.1} parent=1 // pred_check_branch
      %111 = sbr.rel (0) target = $region61
    $region60: #{lstm_encoder_forward.1} parent=1 // pred_region
      %112 = dma.done [#allocation9], 512
    $region61: #{lstm_encoder_forward.1} parent=1 // pred_fallthru
      _
    // Predicated region
    $region62: #{lstm_encoder_forward.1} parent=1 // pred_check
      _
    $region63: #{lstm_encoder_forward.1} parent=1 // pred_check_branch
      %114 = sbr.rel (0) target = $region65
    $region64: #{lstm_encoder_forward.1} parent=1 // pred_region
      %115 = dma.done [#allocation9], 16
    $region65: #{lstm_encoder_forward.1} parent=1 // pred_fallthru
      _
    // Predicated region
    $region66: #{lstm_encoder_forward.1} parent=1 // pred_check
      _
    $region67: #{lstm_encoder_forward.1} parent=1 // pred_check_branch
      %117 = sbr.rel (0) target = $region69
    $region68: #{lstm_encoder_forward.1} parent=1 // pred_region
      %118 = dma.done [#allocation12], 16
    $region69: #{lstm_encoder_forward.1} parent=1 // pred_fallthru
      _
    %v119 = vld [vmem:[%s0] sm:$0xff]
    %v120 = vld [vmem:[%s0 + $0x8] sm:$0xff]
    %v121 = vlaneseq
    %v122 = vand.u32 %v121, 127
    %123 = vset.pattern.permute.xlu0 0
    %124 = vperm.xlu0 %123, %v119
    %v125 = vpop.permute.xlu0 %124
    %126 = vset.pattern.permute.xlu0 0
    %127 = vperm.xlu0 %126, %v120
    %v128 = vpop.permute.xlu0 %127
    %vm129 = vcmp.eq.s32.totalorder %v122, %v125
    %vm130 = vcmp.eq.s32.totalorder %v122, %v128
    %v131 = vsel %vm129, 1, 0
    %v132 = vsel %vm130, 1, 0
    %v133 = vcvt.s32.f32 %v131
    %v134 = vcvt.s32.f32 %v132
    %v135 = vld [vmem:[#allocation2] sm:$0xff]
    %v136 = vld [vmem:[#allocation2 + $0x8] sm:$0xff]
    %v137 = vld [vmem:[#allocation2 + $0x10] sm:$0xff]
    %v138 = vld [vmem:[#allocation2 + $0x18] sm:$0xff]
    %v139 = vld [vmem:[#allocation2 + $0x20] sm:$0xff]
    %v140 = vld [vmem:[#allocation2 + $0x28] sm:$0xff]
    %v141 = vld [vmem:[#allocation2 + $0x30] sm:$0xff]
    %v142 = vld [vmem:[#allocation2 + $0x38] sm:$0xff]
    %v143 = vld [vmem:[#allocation2 + $0x40] sm:$0xff]
    %v144 = vld [vmem:[#allocation2 + $0x48] sm:$0xff]
    %v145 = vld [vmem:[#allocation2 + $0x50] sm:$0xff]
    %v146 = vld [vmem:[#allocation2 + $0x58] sm:$0xff]
    %v147 = vld [vmem:[#allocation2 + $0x60] sm:$0xff]
    %v148 = vld [vmem:[#allocation2 + $0x68] sm:$0xff]
    %v149 = vld [vmem:[#allocation2 + $0x70] sm:$0xff]
    %v150 = vld [vmem:[#allocation2 + $0x78] sm:$0xff]
    %v151 = vld [vmem:[#allocation5] sm:$0x1]
    %v153 = vlaneseq
    %v154 = vshrl.u32 %v153, 7
    %v155 = vsub.s32 0, %v154
    %v156 = vrot.slane %v151, %v155
    %158 = vmatprep.subr.mxu0 0.0
    %159 = vmatpush1.msra.mxu0 %v135
    %160 = vmatprep.subr.mxu0 0.0
    %161 = vmatpush1.msra.mxu0 %v136
    %162 = vmatprep.subr.mxu0 0.0
    %163 = vmatpush1.msra.mxu0 %v137
    %164 = vmatprep.subr.mxu0 0.0
    %165 = vmatpush1.msra.mxu0 %v138
    %166 = vmatprep.subr.mxu0 0.0
    %167 = vmatpush1.msra.mxu0 %v139
    %168 = vmatprep.subr.mxu0 0.0
    %169 = vmatpush1.msra.mxu0 %v140
    %170 = vmatprep.subr.mxu0 0.0
    %171 = vmatpush1.msra.mxu0 %v141
    %172 = vmatprep.subr.mxu0 0.0
    %173 = vmatpush1.msra.mxu0 %v142
    %174 = vmatprep.subr.mxu0 0.0
    %175 = vmatpush1.msra.mxu0 %v143
    %176 = vmatprep.subr.mxu0 0.0
    %177 = vmatpush1.msra.mxu0 %v144
    %178 = vmatprep.subr.mxu0 0.0
    %179 = vmatpush1.msra.mxu0 %v145
    %180 = vmatprep.subr.mxu0 0.0
    %181 = vmatpush1.msra.mxu0 %v146
    %182 = vmatprep.subr.mxu0 0.0
    %183 = vmatpush1.msra.mxu0 %v147
    %184 = vmatprep.subr.mxu0 0.0
    %185 = vmatpush1.msra.mxu0 %v148
    %186 = vmatprep.subr.mxu0 0.0
    %187 = vmatpush1.msra.mxu0 %v149
    %188 = vmatprep.subr.mxu0 0.0
    %189 = vmatpush1.msra.mxu0 %v150
    %190 = vmatprep.subr.mxu0 0.0
    %191 = vmatpush1.msra.mxu0 0.0
    %192 = vmatprep.subr.mxu0 0.0
    %193 = vmatpush1.msra.mxu0 0.0
    %194 = vmatprep.subr.mxu0 0.0
    %195 = vmatpush1.msra.mxu0 0.0
    %196 = vmatprep.subr.mxu0 0.0
    %197 = vmatpush1.msra.mxu0 0.0
    %198 = vmatprep.subr.mxu0 0.0
    %199 = vmatpush1.msra.mxu0 0.0
    %200 = vmatprep.subr.mxu0 0.0
    %201 = vmatpush1.msra.mxu0 0.0
    %202 = vmatprep.subr.mxu0 0.0
    %203 = vmatpush1.msra.mxu0 0.0
    %204 = vmatprep.subr.mxu0 0.0
    %205 = vmatpush1.msra.mxu0 0.0
    %206 = vmatprep.subr.mxu0 0.0
    %207 = vmatpush1.msra.mxu0 0.0
    %208 = vmatprep.subr.mxu0 0.0
    %209 = vmatpush1.msra.mxu0 0.0
    %210 = vmatprep.subr.mxu0 0.0
    %211 = vmatpush1.msra.mxu0 0.0
    %212 = vmatprep.subr.mxu0 0.0
    %213 = vmatpush1.msra.mxu0 0.0
    %214 = vmatprep.subr.mxu0 0.0
    %215 = vmatpush1.msra.mxu0 0.0
    %216 = vmatprep.subr.mxu0 0.0
    %217 = vmatpush1.msra.mxu0 0.0
    %218 = vmatprep.subr.mxu0 0.0
    %219 = vmatpush1.msra.mxu0 0.0
    %220 = vmatprep.subr.mxu0 0.0
    %221 = vmatpush1.msra.mxu0 0.0
    %222 = vmatprep.mubr.f32.mxu0 0.0
    %223 = vmatmul.mubr.f32.gmra.mrb[0].mxu0 %v133
    %v224 = vpop.f32.mrb[0].mxu0
    %v225 = vadd.f32 %v156, %v224
    %v226 = vpop.f32.mrb[0].mxu0
    %227 = vmatprep.mubr.f32.mxu0 0.0
    %228 = vmatmul.mubr.f32.gmra.mrb[0].mxu0 %v134
    %v229 = vpop.f32.mrb[0].mxu0
    %v230 = vadd.f32 %v156, %v229
    %v231 = vpop.f32.mrb[0].mxu0
    %232 = vdwg.mxu0
    %v233 = vld [vmem:[%s3] sm:$0xff]
    %v234 = vld [vmem:[%s3 + $0x8] sm:$0xff]
    %v235 = vld [vmem:[%s3 + $0x10] sm:$0xff]
    %v236 = vld [vmem:[%s3 + $0x18] sm:$0xff]
    %v237 = vld [vmem:[%s9] sm:$0x3]
    %v238 = vld [vmem:[%s10] sm:$0x3]
    %vm239 = vcmask 261120
    %v241 = vsel %vm239, %v237, 0
    %243 = vmatprep.subr.mxu0 0.0
    %244 = vmatpush1.msra.mxu0 %v233
    %245 = vmatprep.subr.mxu0 0.0
    %246 = vmatpush1.msra.mxu0 %v234
    %247 = vmatprep.subr.mxu0 0.0
    %248 = vmatpush1.msra.mxu0 %v235
    %249 = vmatprep.subr.mxu0 0.0
    %250 = vmatpush1.msra.mxu0 %v236
    %251 = vmatprep.subr.mxu0 0.0
    %252 = vmatpush1.msra.mxu0 0.0
    %253 = vmatprep.subr.mxu0 0.0
    %254 = vmatpush1.msra.mxu0 0.0
    %255 = vmatprep.subr.mxu0 0.0
    %256 = vmatpush1.msra.mxu0 0.0
    %257 = vmatprep.subr.mxu0 0.0
    %258 = vmatpush1.msra.mxu0 0.0
    %259 = vmatprep.subr.mxu0 0.0
    %260 = vmatpush1.msra.mxu0 0.0
    %261 = vmatprep.subr.mxu0 0.0
    %262 = vmatpush1.msra.mxu0 0.0
    %263 = vmatprep.subr.mxu0 0.0
    %264 = vmatpush1.msra.mxu0 0.0
    %265 = vmatprep.subr.mxu0 0.0
    %266 = vmatpush1.msra.mxu0 0.0
    %267 = vmatprep.subr.mxu0 0.0
    %268 = vmatpush1.msra.mxu0 0.0
    %269 = vmatprep.subr.mxu0 0.0
    %270 = vmatpush1.msra.mxu0 0.0
    %271 = vmatprep.subr.mxu0 0.0
    %272 = vmatpush1.msra.mxu0 0.0
    %273 = vmatprep.subr.mxu0 0.0
    %274 = vmatpush1.msra.mxu0 0.0
    %275 = vmatprep.subr.mxu0 0.0
    %276 = vmatpush1.msra.mxu0 0.0
    %277 = vmatprep.subr.mxu0 0.0
    %278 = vmatpush1.msra.mxu0 0.0
    %279 = vmatprep.subr.mxu0 0.0
    %280 = vmatpush1.msra.mxu0 0.0
    %281 = vmatprep.subr.mxu0 0.0
    %282 = vmatpush1.msra.mxu0 0.0
    %283 = vmatprep.subr.mxu0 0.0
    %284 = vmatpush1.msra.mxu0 0.0
    %285 = vmatprep.subr.mxu0 0.0
    %286 = vmatpush1.msra.mxu0 0.0
    %287 = vmatprep.subr.mxu0 0.0
    %288 = vmatpush1.msra.mxu0 0.0
    %289 = vmatprep.subr.mxu0 0.0
    %290 = vmatpush1.msra.mxu0 0.0
    %291 = vmatprep.subr.mxu0 0.0
    %292 = vmatpush1.msra.mxu0 0.0
    %293 = vmatprep.subr.mxu0 0.0
    %294 = vmatpush1.msra.mxu0 0.0
    %295 = vmatprep.subr.mxu0 0.0
    %296 = vmatpush1.msra.mxu0 0.0
    %297 = vmatprep.subr.mxu0 0.0
    %298 = vmatpush1.msra.mxu0 0.0
    %299 = vmatprep.subr.mxu0 0.0
    %300 = vmatpush1.msra.mxu0 0.0
    %301 = vmatprep.subr.mxu0 0.0
    %302 = vmatpush1.msra.mxu0 0.0
    %303 = vmatprep.subr.mxu0 0.0
    %304 = vmatpush1.msra.mxu0 0.0
    %305 = vmatprep.subr.mxu0 0.0
    %306 = vmatpush1.msra.mxu0 0.0
    %307 = vmatprep.mubr.f32.mxu0 0.0
    %308 = vmatmul.mubr.f32.gmra.mrb[0].mxu0 %v241
    %v309 = vpop.f32.mrb[0].mxu0
    %v310 = vadd.f32 0.0, %v309
    %v311 = vpop.f32.mrb[0].mxu0
    %312 = vdwg.mxu0
    %v313 = vadd.f32 %v225, %v310
    %v314 = vxor.u32 %v313, 2147483648
    %v315 = vmul.f32 %v314, 1.442695
    %v316 = vpow.pop %v315
    %v317 = vadd.f32 %v316, 1.0
    %v318 = vrcp.pop %v317
    %v319 = vmul.f32 1.0, %v318
    %v320 = vtanh.pop %v313
    %322 = vrot.lane.b32.xlu0 %v238, 32
    %v323 = vpop.permute.xlu0 %322
    %v325 = vmul.f32 %v319, %v323
    %327 = vrot.lane.b32.xlu0 %v320, 64
    %v328 = vpop.permute.xlu0 %327
    %v330 = vmul.f32 %v319, %v328
    %332 = vrot.lane.b32.xlu0 %v330, 32
    %v333 = vpop.permute.xlu0 %332
    %v335 = vadd.f32 %v325, %v333
    %v336 = vtanh.pop %v335
    %338 = vrot.lane.b32.xlu0 %v336, 64
    %v339 = vpop.permute.xlu0 %338
    %v341 = vmul.f32 %v319, %v339
    %343 = vrot.lane.b32.xlu0 %v341, 32
    %v344 = vpop.permute.xlu0 %343
    %v345 = vsel %vm239, %v344, 0
    %347 = vmatprep.subr.mxu0 0.0
    %348 = vmatpush1.msra.mxu0 %v233
    %349 = vmatprep.subr.mxu0 0.0
    %350 = vmatpush1.msra.mxu0 %v234
    %351 = vmatprep.subr.mxu0 0.0
    %352 = vmatpush1.msra.mxu0 %v235
    %353 = vmatprep.subr.mxu0 0.0
    %354 = vmatpush1.msra.mxu0 %v236
    %355 = vmatprep.subr.mxu0 0.0
    %356 = vmatpush1.msra.mxu0 0.0
    %357 = vmatprep.subr.mxu0 0.0
    %358 = vmatpush1.msra.mxu0 0.0
    %359 = vmatprep.subr.mxu0 0.0
    %360 = vmatpush1.msra.mxu0 0.0
    %361 = vmatprep.subr.mxu0 0.0
    %362 = vmatpush1.msra.mxu0 0.0
    %363 = vmatprep.subr.mxu0 0.0
    %364 = vmatpush1.msra.mxu0 0.0
    %365 = vmatprep.subr.mxu0 0.0
    %366 = vmatpush1.msra.mxu0 0.0
    %367 = vmatprep.subr.mxu0 0.0
    %368 = vmatpush1.msra.mxu0 0.0
    %369 = vmatprep.subr.mxu0 0.0
    %370 = vmatpush1.msra.mxu0 0.0
    %371 = vmatprep.subr.mxu0 0.0
    %372 = vmatpush1.msra.mxu0 0.0
    %373 = vmatprep.subr.mxu0 0.0
    %374 = vmatpush1.msra.mxu0 0.0
    %375 = vmatprep.subr.mxu0 0.0
    %376 = vmatpush1.msra.mxu0 0.0
    %377 = vmatprep.subr.mxu0 0.0
    %378 = vmatpush1.msra.mxu0 0.0
    %379 = vmatprep.subr.mxu0 0.0
    %380 = vmatpush1.msra.mxu0 0.0
    %381 = vmatprep.subr.mxu0 0.0
    %382 = vmatpush1.msra.mxu0 0.0
    %383 = vmatprep.subr.mxu0 0.0
    %384 = vmatpush1.msra.mxu0 0.0
    %385 = vmatprep.subr.mxu0 0.0
    %386 = vmatpush1.msra.mxu0 0.0
    %387 = vmatprep.subr.mxu0 0.0
    %388 = vmatpush1.msra.mxu0 0.0
    %389 = vmatprep.subr.mxu0 0.0
    %390 = vmatpush1.msra.mxu0 0.0
    %391 = vmatprep.subr.mxu0 0.0
    %392 = vmatpush1.msra.mxu0 0.0
    %393 = vmatprep.subr.mxu0 0.0
    %394 = vmatpush1.msra.mxu0 0.0
    %395 = vmatprep.subr.mxu0 0.0
    %396 = vmatpush1.msra.mxu0 0.0
    %397 = vmatprep.subr.mxu0 0.0
    %398 = vmatpush1.msra.mxu0 0.0
    %399 = vmatprep.subr.mxu0 0.0
    %400 = vmatpush1.msra.mxu0 0.0
    %401 = vmatprep.subr.mxu0 0.0
    %402 = vmatpush1.msra.mxu0 0.0
    %403 = vmatprep.subr.mxu0 0.0
    %404 = vmatpush1.msra.mxu0 0.0
    %405 = vmatprep.subr.mxu0 0.0
    %406 = vmatpush1.msra.mxu0 0.0
    %407 = vmatprep.subr.mxu0 0.0
    %408 = vmatpush1.msra.mxu0 0.0
    %409 = vmatprep.subr.mxu0 0.0
    %410 = vmatpush1.msra.mxu0 0.0
    %411 = vmatprep.mubr.f32.mxu0 0.0
    %412 = vmatmul.mubr.f32.gmra.mrb[0].mxu0 %v345
    %v413 = vpop.f32.mrb[0].mxu0
    %v414 = vadd.f32 0.0, %v413
    %v415 = vpop.f32.mrb[0].mxu0
    %416 = vdwg.mxu0
    %v418 = vrot.slane %v414, 6
    %v420 = vadd.f32 %v225, %v418
    %v421 = vxor.u32 %v420, 2147483648
    %v422 = vmul.f32 %v421, 1.442695
    %v423 = vpow.pop %v422
    %v424 = vadd.f32 %v423, 1.0
    %v425 = vrcp.pop %v424
    %v426 = vmul.f32 1.0, %v425
    %v427 = vtanh.pop %v420
    %v429 = vrot.slane %v335, 6
    %v431 = vmul.f32 %v426, %v429
    %433 = vrot.lane.b32.xlu0 %v427, 64
    %v434 = vpop.permute.xlu0 %433
    %v436 = vmul.f32 %v426, %v434
    %438 = vrot.lane.b32.xlu0 %v436, 32
    %v439 = vpop.permute.xlu0 %438
    %v441 = vadd.f32 %v431, %v439
    %v442 = vtanh.pop %v441
    %444 = vrot.lane.b32.xlu0 %v442, 64
    %v445 = vpop.permute.xlu0 %444
    %v447 = vmul.f32 %v426, %v445
    %v449 = vrot.slane %v447, 2
    %450 = vrot.lane.b32.xlu0 %v449, 32
    %v451 = vpop.permute.xlu0 %450
    %v452 = vsel %vm239, %v451, 0
    %454 = vmatprep.subr.mxu0 0.0
    %455 = vmatpush1.msra.mxu0 %v233
    %456 = vmatprep.subr.mxu0 0.0
    %457 = vmatpush1.msra.mxu0 %v234
    %458 = vmatprep.subr.mxu0 0.0
    %459 = vmatpush1.msra.mxu0 %v235
    %460 = vmatprep.subr.mxu0 0.0
    %461 = vmatpush1.msra.mxu0 %v236
    %462 = vmatprep.subr.mxu0 0.0
    %463 = vmatpush1.msra.mxu0 0.0
    %464 = vmatprep.subr.mxu0 0.0
    %465 = vmatpush1.msra.mxu0 0.0
    %466 = vmatprep.subr.mxu0 0.0
    %467 = vmatpush1.msra.mxu0 0.0
    %468 = vmatprep.subr.mxu0 0.0
    %469 = vmatpush1.msra.mxu0 0.0
    %470 = vmatprep.subr.mxu0 0.0
    %471 = vmatpush1.msra.mxu0 0.0
    %472 = vmatprep.subr.mxu0 0.0
    %473 = vmatpush1.msra.mxu0 0.0
    %474 = vmatprep.subr.mxu0 0.0
    %475 = vmatpush1.msra.mxu0 0.0
    %476 = vmatprep.subr.mxu0 0.0
    %477 = vmatpush1.msra.mxu0 0.0
    %478 = vmatprep.subr.mxu0 0.0
    %479 = vmatpush1.msra.mxu0 0.0
    %480 = vmatprep.subr.mxu0 0.0
    %481 = vmatpush1.msra.mxu0 0.0
    %482 = vmatprep.subr.mxu0 0.0
    %483 = vmatpush1.msra.mxu0 0.0
    %484 = vmatprep.subr.mxu0 0.0
    %485 = vmatpush1.msra.mxu0 0.0
    %486 = vmatprep.subr.mxu0 0.0
    %487 = vmatpush1.msra.mxu0 0.0
    %488 = vmatprep.subr.mxu0 0.0
    %489 = vmatpush1.msra.mxu0 0.0
    %490 = vmatprep.subr.mxu0 0.0
    %491 = vmatpush1.msra.mxu0 0.0
    %492 = vmatprep.subr.mxu0 0.0
    %493 = vmatpush1.msra.mxu0 0.0
    %494 = vmatprep.subr.mxu0 0.0
    %495 = vmatpush1.msra.mxu0 0.0
    %496 = vmatprep.subr.mxu0 0.0
    %497 = vmatpush1.msra.mxu0 0.0
    %498 = vmatprep.subr.mxu0 0.0
    %499 = vmatpush1.msra.mxu0 0.0
    %500 = vmatprep.subr.mxu0 0.0
    %501 = vmatpush1.msra.mxu0 0.0
    %502 = vmatprep.subr.mxu0 0.0
    %503 = vmatpush1.msra.mxu0 0.0
    %504 = vmatprep.subr.mxu0 0.0
    %505 = vmatpush1.msra.mxu0 0.0
    %506 = vmatprep.subr.mxu0 0.0
    %507 = vmatpush1.msra.mxu0 0.0
    %508 = vmatprep.subr.mxu0 0.0
    %509 = vmatpush1.msra.mxu0 0.0
    %510 = vmatprep.subr.mxu0 0.0
    %511 = vmatpush1.msra.mxu0 0.0
    %512 = vmatprep.subr.mxu0 0.0
    %513 = vmatpush1.msra.mxu0 0.0
    %514 = vmatprep.subr.mxu0 0.0
    %515 = vmatpush1.msra.mxu0 0.0
    %516 = vmatprep.subr.mxu0 0.0
    %517 = vmatpush1.msra.mxu0 0.0
    %518 = vmatprep.mubr.f32.mxu0 0.0
    %519 = vmatmul.mubr.f32.gmra.mrb[0].mxu0 %v452
    %v520 = vpop.f32.mrb[0].mxu0
    %v521 = vadd.f32 0.0, %v520
    %v522 = vpop.f32.mrb[0].mxu0
    %523 = vdwg.mxu0
    %v525 = vrot.slane %v521, 4
    %v527 = vadd.f32 %v225, %v525
    %v528 = vxor.u32 %v527, 2147483648
    %v529 = vmul.f32 %v528, 1.442695
    %v530 = vpow.pop %v529
    %v531 = vadd.f32 %v530, 1.0
    %v532 = vrcp.pop %v531
    %v533 = vmul.f32 1.0, %v532
    %v534 = vtanh.pop %v527
    %v536 = vrot.slane %v441, 6
    %v538 = vmul.f32 %v533, %v536
    %540 = vrot.lane.b32.xlu0 %v534, 64
    %v541 = vpop.permute.xlu0 %540
    %v543 = vmul.f32 %v533, %v541
    %545 = vrot.lane.b32.xlu0 %v543, 32
    %v546 = vpop.permute.xlu0 %545
    %v548 = vadd.f32 %v538, %v546
    %v549 = vtanh.pop %v548
    %551 = vrot.lane.b32.xlu0 %v549, 64
    %v552 = vpop.permute.xlu0 %551
    %v554 = vmul.f32 %v533, %v552
    %v556 = vrot.slane %v554, 4
    %557 = vrot.lane.b32.xlu0 %v556, 32
    %v558 = vpop.permute.xlu0 %557
    %v559 = vsel %vm239, %v558, 0
    %561 = vmatprep.subr.mxu0 0.0
    %562 = vmatpush1.msra.mxu0 %v233
    %563 = vmatprep.subr.mxu0 0.0
    %564 = vmatpush1.msra.mxu0 %v234
    %565 = vmatprep.subr.mxu0 0.0
    %566 = vmatpush1.msra.mxu0 %v235
    %567 = vmatprep.subr.mxu0 0.0
    %568 = vmatpush1.msra.mxu0 %v236
    %569 = vmatprep.subr.mxu0 0.0
    %570 = vmatpush1.msra.mxu0 0.0
    %571 = vmatprep.subr.mxu0 0.0
    %572 = vmatpush1.msra.mxu0 0.0
    %573 = vmatprep.subr.mxu0 0.0
    %574 = vmatpush1.msra.mxu0 0.0
    %575 = vmatprep.subr.mxu0 0.0
    %576 = vmatpush1.msra.mxu0 0.0
    %577 = vmatprep.subr.mxu0 0.0
    %578 = vmatpush1.msra.mxu0 0.0
    %579 = vmatprep.subr.mxu0 0.0
    %580 = vmatpush1.msra.mxu0 0.0
    %581 = vmatprep.subr.mxu0 0.0
    %582 = vmatpush1.msra.mxu0 0.0
    %583 = vmatprep.subr.mxu0 0.0
    %584 = vmatpush1.msra.mxu0 0.0
    %585 = vmatprep.subr.mxu0 0.0
    %586 = vmatpush1.msra.mxu0 0.0
    %587 = vmatprep.subr.mxu0 0.0
    %588 = vmatpush1.msra.mxu0 0.0
    %589 = vmatprep.subr.mxu0 0.0
    %590 = vmatpush1.msra.mxu0 0.0
    %591 = vmatprep.subr.mxu0 0.0
    %592 = vmatpush1.msra.mxu0 0.0
    %593 = vmatprep.subr.mxu0 0.0
    %594 = vmatpush1.msra.mxu0 0.0
    %595 = vmatprep.subr.mxu0 0.0
    %596 = vmatpush1.msra.mxu0 0.0
    %597 = vmatprep.subr.mxu0 0.0
    %598 = vmatpush1.msra.mxu0 0.0
    %599 = vmatprep.subr.mxu0 0.0
    %600 = vmatpush1.msra.mxu0 0.0
    %601 = vmatprep.subr.mxu0 0.0
    %602 = vmatpush1.msra.mxu0 0.0
    %603 = vmatprep.subr.mxu0 0.0
    %604 = vmatpush1.msra.mxu0 0.0
    %605 = vmatprep.subr.mxu0 0.0
    %606 = vmatpush1.msra.mxu0 0.0
    %607 = vmatprep.subr.mxu0 0.0
    %608 = vmatpush1.msra.mxu0 0.0
    %609 = vmatprep.subr.mxu0 0.0
    %610 = vmatpush1.msra.mxu0 0.0
    %611 = vmatprep.subr.mxu0 0.0
    %612 = vmatpush1.msra.mxu0 0.0
    %613 = vmatprep.subr.mxu0 0.0
    %614 = vmatpush1.msra.mxu0 0.0
    %615 = vmatprep.subr.mxu0 0.0
    %616 = vmatpush1.msra.mxu0 0.0
    %617 = vmatprep.subr.mxu0 0.0
    %618 = vmatpush1.msra.mxu0 0.0
    %619 = vmatprep.subr.mxu0 0.0
    %620 = vmatpush1.msra.mxu0 0.0
    %621 = vmatprep.subr.mxu0 0.0
    %622 = vmatpush1.msra.mxu0 0.0
    %623 = vmatprep.subr.mxu0 0.0
    %624 = vmatpush1.msra.mxu0 0.0
    %625 = vmatprep.mubr.f32.mxu0 0.0
    %626 = vmatmul.mubr.f32.gmra.mrb[0].mxu0 %v559
    %v627 = vpop.f32.mrb[0].mxu0
    %v628 = vadd.f32 0.0, %v627
    %v629 = vpop.f32.mrb[0].mxu0
    %630 = vdwg.mxu0
    %v632 = vrot.slane %v628, 2
    %v634 = vadd.f32 %v225, %v632
    %v635 = vxor.u32 %v634, 2147483648
    %v636 = vmul.f32 %v635, 1.442695
    %v637 = vpow.pop %v636
    %v638 = vadd.f32 %v637, 1.0
    %v639 = vrcp.pop %v638
    %v640 = vmul.f32 1.0, %v639
    %v641 = vtanh.pop %v634
    %v643 = vrot.slane %v548, 6
    %v645 = vmul.f32 %v640, %v643
    %647 = vrot.lane.b32.xlu0 %v641, 64
    %v648 = vpop.permute.xlu0 %647
    %v650 = vmul.f32 %v640, %v648
    %652 = vrot.lane.b32.xlu0 %v650, 32
    %v653 = vpop.permute.xlu0 %652
    %v655 = vadd.f32 %v645, %v653
    %v656 = vtanh.pop %v655
    %658 = vrot.lane.b32.xlu0 %v656, 64
    %v659 = vpop.permute.xlu0 %658
    %v661 = vmul.f32 %v640, %v659
    %v663 = vrot.slane %v661, 6
    %664 = vrot.lane.b32.xlu0 %v663, 32
    %v665 = vpop.permute.xlu0 %664
    %v666 = vsel %vm239, %v665, 0
    %668 = vmatprep.subr.mxu0 0.0
    %669 = vmatpush1.msra.mxu0 %v233
    %670 = vmatprep.subr.mxu0 0.0
    %671 = vmatpush1.msra.mxu0 %v234
    %672 = vmatprep.subr.mxu0 0.0
    %673 = vmatpush1.msra.mxu0 %v235
    %674 = vmatprep.subr.mxu0 0.0
    %675 = vmatpush1.msra.mxu0 %v236
    %676 = vmatprep.subr.mxu0 0.0
    %677 = vmatpush1.msra.mxu0 0.0
    %678 = vmatprep.subr.mxu0 0.0
    %679 = vmatpush1.msra.mxu0 0.0
    %680 = vmatprep.subr.mxu0 0.0
    %681 = vmatpush1.msra.mxu0 0.0
    %682 = vmatprep.subr.mxu0 0.0
    %683 = vmatpush1.msra.mxu0 0.0
    %684 = vmatprep.subr.mxu0 0.0
    %685 = vmatpush1.msra.mxu0 0.0
    %686 = vmatprep.subr.mxu0 0.0
    %687 = vmatpush1.msra.mxu0 0.0
    %688 = vmatprep.subr.mxu0 0.0
    %689 = vmatpush1.msra.mxu0 0.0
    %690 = vmatprep.subr.mxu0 0.0
    %691 = vmatpush1.msra.mxu0 0.0
    %692 = vmatprep.subr.mxu0 0.0
    %693 = vmatpush1.msra.mxu0 0.0
    %694 = vmatprep.subr.mxu0 0.0
    %695 = vmatpush1.msra.mxu0 0.0
    %696 = vmatprep.subr.mxu0 0.0
    %697 = vmatpush1.msra.mxu0 0.0
    %698 = vmatprep.subr.mxu0 0.0
    %699 = vmatpush1.msra.mxu0 0.0
    %700 = vmatprep.subr.mxu0 0.0
    %701 = vmatpush1.msra.mxu0 0.0
    %702 = vmatprep.subr.mxu0 0.0
    %703 = vmatpush1.msra.mxu0 0.0
    %704 = vmatprep.subr.mxu0 0.0
    %705 = vmatpush1.msra.mxu0 0.0
    %706 = vmatprep.subr.mxu0 0.0
    %707 = vmatpush1.msra.mxu0 0.0
    %708 = vmatprep.subr.mxu0 0.0
    %709 = vmatpush1.msra.mxu0 0.0
    %710 = vmatprep.subr.mxu0 0.0
    %711 = vmatpush1.msra.mxu0 0.0
    %712 = vmatprep.subr.mxu0 0.0
    %713 = vmatpush1.msra.mxu0 0.0
    %714 = vmatprep.subr.mxu0 0.0
    %715 = vmatpush1.msra.mxu0 0.0
    %716 = vmatprep.subr.mxu0 0.0
    %717 = vmatpush1.msra.mxu0 0.0
    %718 = vmatprep.subr.mxu0 0.0
    %719 = vmatpush1.msra.mxu0 0.0
    %720 = vmatprep.subr.mxu0 0.0
    %721 = vmatpush1.msra.mxu0 0.0
    %722 = vmatprep.subr.mxu0 0.0
    %723 = vmatpush1.msra.mxu0 0.0
    %724 = vmatprep.subr.mxu0 0.0
    %725 = vmatpush1.msra.mxu0 0.0
    %726 = vmatprep.subr.mxu0 0.0
    %727 = vmatpush1.msra.mxu0 0.0
    %728 = vmatprep.subr.mxu0 0.0
    %729 = vmatpush1.msra.mxu0 0.0
    %730 = vmatprep.subr.mxu0 0.0
    %731 = vmatpush1.msra.mxu0 0.0
    %732 = vmatprep.mubr.f32.mxu0 0.0
    %733 = vmatmul.mubr.f32.gmra.mrb[0].mxu0 %v666
    %v734 = vpop.f32.mrb[0].mxu0
    %v735 = vadd.f32 0.0, %v734
    %v736 = vpop.f32.mrb[0].mxu0
    %737 = vdwg.mxu0
    %v738 = vadd.f32 %v230, %v735
    %v739 = vxor.u32 %v738, 2147483648
    %v740 = vmul.f32 %v739, 1.442695
    %v741 = vpow.pop %v740
    %v742 = vadd.f32 %v741, 1.0
    %v743 = vrcp.pop %v742
    %v744 = vmul.f32 1.0, %v743
    %v745 = vtanh.pop %v738
    %v747 = vrot.slane %v655, 6
    %v749 = vmul.f32 %v744, %v747
    %751 = vrot.lane.b32.xlu0 %v745, 64
    %v752 = vpop.permute.xlu0 %751
    %v754 = vmul.f32 %v744, %v752
    %756 = vrot.lane.b32.xlu0 %v754, 32
    %v757 = vpop.permute.xlu0 %756
    %v759 = vadd.f32 %v749, %v757
    %v760 = vtanh.pop %v759
    %762 = vrot.lane.b32.xlu0 %v760, 64
    %v763 = vpop.permute.xlu0 %762
    %v765 = vmul.f32 %v744, %v763
    %767 = vrot.lane.b32.xlu0 %v765, 32
    %v768 = vpop.permute.xlu0 %767
    %v769 = vsel %vm239, %v768, 0
    %771 = vmatprep.subr.mxu0 0.0
    %772 = vmatpush1.msra.mxu0 %v233
    %773 = vmatprep.subr.mxu0 0.0
    %774 = vmatpush1.msra.mxu0 %v234
    %775 = vmatprep.subr.mxu0 0.0
    %776 = vmatpush1.msra.mxu0 %v235
    %777 = vmatprep.subr.mxu0 0.0
    %778 = vmatpush1.msra.mxu0 %v236
    %779 = vmatprep.subr.mxu0 0.0
    %780 = vmatpush1.msra.mxu0 0.0
    %781 = vmatprep.subr.mxu0 0.0
    %782 = vmatpush1.msra.mxu0 0.0
    %783 = vmatprep.subr.mxu0 0.0
    %784 = vmatpush1.msra.mxu0 0.0
    %785 = vmatprep.subr.mxu0 0.0
    %786 = vmatpush1.msra.mxu0 0.0
    %787 = vmatprep.subr.mxu0 0.0
    %788 = vmatpush1.msra.mxu0 0.0
    %789 = vmatprep.subr.mxu0 0.0
    %790 = vmatpush1.msra.mxu0 0.0
    %791 = vmatprep.subr.mxu0 0.0
    %792 = vmatpush1.msra.mxu0 0.0
    %793 = vmatprep.subr.mxu0 0.0
    %794 = vmatpush1.msra.mxu0 0.0
    %795 = vmatprep.subr.mxu0 0.0
    %796 = vmatpush1.msra.mxu0 0.0
    %797 = vmatprep.subr.mxu0 0.0
    %798 = vmatpush1.msra.mxu0 0.0
    %799 = vmatprep.subr.mxu0 0.0
    %800 = vmatpush1.msra.mxu0 0.0
    %801 = vmatprep.subr.mxu0 0.0
    %802 = vmatpush1.msra.mxu0 0.0
    %803 = vmatprep.subr.mxu0 0.0
    %804 = vmatpush1.msra.mxu0 0.0
    %805 = vmatprep.subr.mxu0 0.0
    %806 = vmatpush1.msra.mxu0 0.0
    %807 = vmatprep.subr.mxu0 0.0
    %808 = vmatpush1.msra.mxu0 0.0
    %809 = vmatprep.subr.mxu0 0.0
    %810 = vmatpush1.msra.mxu0 0.0
    %811 = vmatprep.subr.mxu0 0.0
    %812 = vmatpush1.msra.mxu0 0.0
    %813 = vmatprep.subr.mxu0 0.0
    %814 = vmatpush1.msra.mxu0 0.0
    %815 = vmatprep.subr.mxu0 0.0
    %816 = vmatpush1.msra.mxu0 0.0
    %817 = vmatprep.subr.mxu0 0.0
    %818 = vmatpush1.msra.mxu0 0.0
    %819 = vmatprep.subr.mxu0 0.0
    %820 = vmatpush1.msra.mxu0 0.0
    %821 = vmatprep.subr.mxu0 0.0
    %822 = vmatpush1.msra.mxu0 0.0
    %823 = vmatprep.subr.mxu0 0.0
    %824 = vmatpush1.msra.mxu0 0.0
    %825 = vmatprep.subr.mxu0 0.0
    %826 = vmatpush1.msra.mxu0 0.0
    %827 = vmatprep.subr.mxu0 0.0
    %828 = vmatpush1.msra.mxu0 0.0
    %829 = vmatprep.subr.mxu0 0.0
    %830 = vmatpush1.msra.mxu0 0.0
    %831 = vmatprep.subr.mxu0 0.0
    %832 = vmatpush1.msra.mxu0 0.0
    %833 = vmatprep.subr.mxu0 0.0
    %834 = vmatpush1.msra.mxu0 0.0
    %835 = vmatprep.mubr.f32.mxu0 0.0
    %836 = vmatmul.mubr.f32.gmra.mrb[0].mxu0 %v769
    %v837 = vpop.f32.mrb[0].mxu0
    %v838 = vadd.f32 0.0, %v837
    %v839 = vpop.f32.mrb[0].mxu0
    %840 = vdwg.mxu0
    %v842 = vrot.slane %v838, 6
    %v844 = vadd.f32 %v230, %v842
    %v845 = vxor.u32 %v844, 2147483648
    %v846 = vmul.f32 %v845, 1.442695
    %v847 = vpow.pop %v846
    %v848 = vadd.f32 %v847, 1.0
    %v849 = vrcp.pop %v848
    %v850 = vmul.f32 1.0, %v849
    %v851 = vtanh.pop %v844
    %v853 = vrot.slane %v759, 6
    %v855 = vmul.f32 %v850, %v853
    %857 = vrot.lane.b32.xlu0 %v851, 64
    %v858 = vpop.permute.xlu0 %857
    %v860 = vmul.f32 %v850, %v858
    %862 = vrot.lane.b32.xlu0 %v860, 32
    %v863 = vpop.permute.xlu0 %862
    %v865 = vadd.f32 %v855, %v863
    %v866 = vtanh.pop %v865
    %868 = vrot.lane.b32.xlu0 %v866, 64
    %v869 = vpop.permute.xlu0 %868
    %v871 = vmul.f32 %v850, %v869
    %v873 = vrot.slane %v871, 2
    %874 = vrot.lane.b32.xlu0 %v873, 32
    %v875 = vpop.permute.xlu0 %874
    %v876 = vsel %vm239, %v875, 0
    %878 = vmatprep.subr.mxu0 0.0
    %879 = vmatpush1.msra.mxu0 %v233
    %880 = vmatprep.subr.mxu0 0.0
    %881 = vmatpush1.msra.mxu0 %v234
    %882 = vmatprep.subr.mxu0 0.0
    %883 = vmatpush1.msra.mxu0 %v235
    %884 = vmatprep.subr.mxu0 0.0
    %885 = vmatpush1.msra.mxu0 %v236
    %886 = vmatprep.subr.mxu0 0.0
    %887 = vmatpush1.msra.mxu0 0.0
    %888 = vmatprep.subr.mxu0 0.0
    %889 = vmatpush1.msra.mxu0 0.0
    %890 = vmatprep.subr.mxu0 0.0
    %891 = vmatpush1.msra.mxu0 0.0
    %892 = vmatprep.subr.mxu0 0.0
    %893 = vmatpush1.msra.mxu0 0.0
    %894 = vmatprep.subr.mxu0 0.0
    %895 = vmatpush1.msra.mxu0 0.0
    %896 = vmatprep.subr.mxu0 0.0
    %897 = vmatpush1.msra.mxu0 0.0
    %898 = vmatprep.subr.mxu0 0.0
    %899 = vmatpush1.msra.mxu0 0.0
    %900 = vmatprep.subr.mxu0 0.0
    %901 = vmatpush1.msra.mxu0 0.0
    %902 = vmatprep.subr.mxu0 0.0
    %903 = vmatpush1.msra.mxu0 0.0
    %904 = vmatprep.subr.mxu0 0.0
    %905 = vmatpush1.msra.mxu0 0.0
    %906 = vmatprep.subr.mxu0 0.0
    %907 = vmatpush1.msra.mxu0 0.0
    %908 = vmatprep.subr.mxu0 0.0
    %909 = vmatpush1.msra.mxu0 0.0
    %910 = vmatprep.subr.mxu0 0.0
    %911 = vmatpush1.msra.mxu0 0.0
    %912 = vmatprep.subr.mxu0 0.0
    %913 = vmatpush1.msra.mxu0 0.0
    %914 = vmatprep.subr.mxu0 0.0
    %915 = vmatpush1.msra.mxu0 0.0
    %916 = vmatprep.subr.mxu0 0.0
    %917 = vmatpush1.msra.mxu0 0.0
    %918 = vmatprep.subr.mxu0 0.0
    %919 = vmatpush1.msra.mxu0 0.0
    %920 = vmatprep.subr.mxu0 0.0
    %921 = vmatpush1.msra.mxu0 0.0
    %922 = vmatprep.subr.mxu0 0.0
    %923 = vmatpush1.msra.mxu0 0.0
    %924 = vmatprep.subr.mxu0 0.0
    %925 = vmatpush1.msra.mxu0 0.0
    %926 = vmatprep.subr.mxu0 0.0
    %927 = vmatpush1.msra.mxu0 0.0
    %928 = vmatprep.subr.mxu0 0.0
    %929 = vmatpush1.msra.mxu0 0.0
    %930 = vmatprep.subr.mxu0 0.0
    %931 = vmatpush1.msra.mxu0 0.0
    %932 = vmatprep.subr.mxu0 0.0
    %933 = vmatpush1.msra.mxu0 0.0
    %934 = vmatprep.subr.mxu0 0.0
    %935 = vmatpush1.msra.mxu0 0.0
    %936 = vmatprep.subr.mxu0 0.0
    %937 = vmatpush1.msra.mxu0 0.0
    %938 = vmatprep.subr.mxu0 0.0
    %939 = vmatpush1.msra.mxu0 0.0
    %940 = vmatprep.subr.mxu0 0.0
    %941 = vmatpush1.msra.mxu0 0.0
    %942 = vmatprep.mubr.f32.mxu0 0.0
    %943 = vmatmul.mubr.f32.gmra.mrb[0].mxu0 %v876
    %v944 = vpop.f32.mrb[0].mxu0
    %v945 = vadd.f32 0.0, %v944
    %v946 = vpop.f32.mrb[0].mxu0
    %947 = vdwg.mxu0
    %v949 = vrot.slane %v945, 4
    %v951 = vadd.f32 %v230, %v949
    %v952 = vxor.u32 %v951, 2147483648
    %v953 = vmul.f32 %v952, 1.442695
    %v954 = vpow.pop %v953
    %v955 = vadd.f32 %v954, 1.0
    %v956 = vrcp.pop %v955
    %v957 = vmul.f32 1.0, %v956
    %v958 = vtanh.pop %v951
    %v960 = vrot.slane %v865, 6
    %v962 = vmul.f32 %v957, %v960
    %964 = vrot.lane.b32.xlu0 %v958, 64
    %v965 = vpop.permute.xlu0 %964
    %v967 = vmul.f32 %v957, %v965
    %969 = vrot.lane.b32.xlu0 %v967, 32
    %v970 = vpop.permute.xlu0 %969
    %v972 = vadd.f32 %v962, %v970
    %v973 = vtanh.pop %v972
    %975 = vrot.lane.b32.xlu0 %v973, 64
    %v976 = vpop.permute.xlu0 %975
    %v978 = vmul.f32 %v957, %v976
    %v980 = vrot.slane %v978, 4
    %981 = vrot.lane.b32.xlu0 %v980, 32
    %v982 = vpop.permute.xlu0 %981
    %v983 = vsel %vm239, %v982, 0
    %985 = vmatprep.subr.mxu0 0.0
    %986 = vmatpush1.msra.mxu0 %v233
    %987 = vmatprep.subr.mxu0 0.0
    %988 = vmatpush1.msra.mxu0 %v234
    %989 = vmatprep.subr.mxu0 0.0
    %990 = vmatpush1.msra.mxu0 %v235
    %991 = vmatprep.subr.mxu0 0.0
    %992 = vmatpush1.msra.mxu0 %v236
    %993 = vmatprep.subr.mxu0 0.0
    %994 = vmatpush1.msra.mxu0 0.0
    %995 = vmatprep.subr.mxu0 0.0
    %996 = vmatpush1.msra.mxu0 0.0
    %997 = vmatprep.subr.mxu0 0.0
    %998 = vmatpush1.msra.mxu0 0.0
    %999 = vmatprep.subr.mxu0 0.0
    %1000 = vmatpush1.msra.mxu0 0.0
    %1001 = vmatprep.subr.mxu0 0.0
    %1002 = vmatpush1.msra.mxu0 0.0
    %1003 = vmatprep.subr.mxu0 0.0
    %1004 = vmatpush1.msra.mxu0 0.0
    %1005 = vmatprep.subr.mxu0 0.0
    %1006 = vmatpush1.msra.mxu0 0.0
    %1007 = vmatprep.subr.mxu0 0.0
    %1008 = vmatpush1.msra.mxu0 0.0
    %1009 = vmatprep.subr.mxu0 0.0
    %1010 = vmatpush1.msra.mxu0 0.0
    %1011 = vmatprep.subr.mxu0 0.0
    %1012 = vmatpush1.msra.mxu0 0.0
    %1013 = vmatprep.subr.mxu0 0.0
    %1014 = vmatpush1.msra.mxu0 0.0
    %1015 = vmatprep.subr.mxu0 0.0
    %1016 = vmatpush1.msra.mxu0 0.0
    %1017 = vmatprep.subr.mxu0 0.0
    %1018 = vmatpush1.msra.mxu0 0.0
    %1019 = vmatprep.subr.mxu0 0.0
    %1020 = vmatpush1.msra.mxu0 0.0
    %1021 = vmatprep.subr.mxu0 0.0
    %1022 = vmatpush1.msra.mxu0 0.0
    %1023 = vmatprep.subr.mxu0 0.0
    %1024 = vmatpush1.msra.mxu0 0.0
    %1025 = vmatprep.subr.mxu0 0.0
    %1026 = vmatpush1.msra.mxu0 0.0
    %1027 = vmatprep.subr.mxu0 0.0
    %1028 = vmatpush1.msra.mxu0 0.0
    %1029 = vmatprep.subr.mxu0 0.0
    %1030 = vmatpush1.msra.mxu0 0.0
    %1031 = vmatprep.subr.mxu0 0.0
    %1032 = vmatpush1.msra.mxu0 0.0
    %1033 = vmatprep.subr.mxu0 0.0
    %1034 = vmatpush1.msra.mxu0 0.0
    %1035 = vmatprep.subr.mxu0 0.0
    %1036 = vmatpush1.msra.mxu0 0.0
    %1037 = vmatprep.subr.mxu0 0.0
    %1038 = vmatpush1.msra.mxu0 0.0
    %1039 = vmatprep.subr.mxu0 0.0
    %1040 = vmatpush1.msra.mxu0 0.0
    %1041 = vmatprep.subr.mxu0 0.0
    %1042 = vmatpush1.msra.mxu0 0.0
    %1043 = vmatprep.subr.mxu0 0.0
    %1044 = vmatpush1.msra.mxu0 0.0
    %1045 = vmatprep.subr.mxu0 0.0
    %1046 = vmatpush1.msra.mxu0 0.0
    %1047 = vmatprep.subr.mxu0 0.0
    %1048 = vmatpush1.msra.mxu0 0.0
    %1049 = vmatprep.mubr.f32.mxu0 0.0
    %1050 = vmatmul.mubr.f32.gmra.mrb[0].mxu0 %v983
    %v1051 = vpop.f32.mrb[0].mxu0
    %v1052 = vadd.f32 0.0, %v1051
    %v1053 = vpop.f32.mrb[0].mxu0
    %1054 = vdwg.mxu0
    %v1056 = vrot.slane %v1052, 2
    %v1058 = vadd.f32 %v230, %v1056
    %v1059 = vxor.u32 %v1058, 2147483648
    %v1060 = vmul.f32 %v1059, 1.442695
    %v1061 = vpow.pop %v1060
    %v1062 = vadd.f32 %v1061, 1.0
    %v1063 = vrcp.pop %v1062
    %v1064 = vmul.f32 1.0, %v1063
    %v1065 = vtanh.pop %v1058
    %v1067 = vrot.slane %v972, 6
    %v1069 = vmul.f32 %v1064, %v1067
    %1071 = vrot.lane.b32.xlu0 %v1065, 64
    %v1072 = vpop.permute.xlu0 %1071
    %v1074 = vmul.f32 %v1064, %v1072
    %1076 = vrot.lane.b32.xlu0 %v1074, 32
    %v1077 = vpop.permute.xlu0 %1076
    %v1079 = vadd.f32 %v1069, %v1077
    %v1080 = vtanh.pop %v1079
    %1082 = vrot.lane.b32.xlu0 %v1080, 64
    %v1083 = vpop.permute.xlu0 %1082
    %v1085 = vmul.f32 %v1064, %v1083
    %1087 = vrot.lane.b32.xlu0 %v1085, 32
    %v1088 = vpop.permute.xlu0 %1087
    %vm1090 = vcmask 261126
    %1091 = vst.msk [vmem:[#allocation13 - $0x6] sm:$0xc0] %vm1090, %v1088
    %1093 = vrot.lane.b32.xlu0 %v1079, 96
    %v1094 = vpop.permute.xlu0 %1093
    %1096 = vst.msk [vmem:[#allocation14 - $0x6] sm:$0xc0] %vm1090, %v1094
    %vm1097 = vcmask 1041408
    %v1098 = vsel %vm1097, %v341, %v447
    %vm1099 = vcmask 1043456
    %v1100 = vsel %vm1099, %v1098, %v554
    %vm1101 = vcmask 1045504
    %v1102 = vsel %vm1101, %v1100, %v661
    %v1103 = vsel %vm1097, %v765, %v871
    %v1104 = vsel %vm1099, %v1103, %v978
    %v1105 = vsel %vm1101, %v1104, %v1085
    %v1106 = vld [vmem:[#allocation7] sm:$0xff]
    %v1107 = vld [vmem:[#allocation7 + $0x8] sm:$0xff]
    %v1108 = vld [vmem:[#allocation7 + $0x10] sm:$0xff]
    %v1109 = vld [vmem:[#allocation7 + $0x18] sm:$0xff]
    %v1110 = vld [vmem:[#allocation10] sm:$0x1]
    %v1112 = vlaneseq
    %v1113 = vshrl.u32 %v1112, 7
    %v1114 = vsub.s32 0, %v1113
    %v1115 = vrot.slane %v1110, %v1114
    %1119 = vrot.lane.b32.xlu0 %v1102, 32
    %v1120 = vpop.permute.xlu0 %1119
    %1121 = vrot.lane.b32.xlu0 %v1105, 32
    %v1122 = vpop.permute.xlu0 %1121
    %v1123 = vsel %vm239, %v1120, 0
    %v1125 = vsel %vm239, %v1122, 0
    %1127 = vmatprep.subr.mxu0 0.0
    %1128 = vmatpush1.msra.mxu0 %v1106
    %1129 = vmatprep.subr.mxu0 0.0
    %1130 = vmatpush1.msra.mxu0 %v1107
    %1131 = vmatprep.subr.mxu0 0.0
    %1132 = vmatpush1.msra.mxu0 %v1108
    %1133 = vmatprep.subr.mxu0 0.0
    %1134 = vmatpush1.msra.mxu0 %v1109
    %1135 = vmatprep.subr.mxu0 0.0
    %1136 = vmatpush1.msra.mxu0 0.0
    %1137 = vmatprep.subr.mxu0 0.0
    %1138 = vmatpush1.msra.mxu0 0.0
    %1139 = vmatprep.subr.mxu0 0.0
    %1140 = vmatpush1.msra.mxu0 0.0
    %1141 = vmatprep.subr.mxu0 0.0
    %1142 = vmatpush1.msra.mxu0 0.0
    %1143 = vmatprep.subr.mxu0 0.0
    %1144 = vmatpush1.msra.mxu0 0.0
    %1145 = vmatprep.subr.mxu0 0.0
    %1146 = vmatpush1.msra.mxu0 0.0
    %1147 = vmatprep.subr.mxu0 0.0
    %1148 = vmatpush1.msra.mxu0 0.0
    %1149 = vmatprep.subr.mxu0 0.0
    %1150 = vmatpush1.msra.mxu0 0.0
    %1151 = vmatprep.subr.mxu0 0.0
    %1152 = vmatpush1.msra.mxu0 0.0
    %1153 = vmatprep.subr.mxu0 0.0
    %1154 = vmatpush1.msra.mxu0 0.0
    %1155 = vmatprep.subr.mxu0 0.0
    %1156 = vmatpush1.msra.mxu0 0.0
    %1157 = vmatprep.subr.mxu0 0.0
    %1158 = vmatpush1.msra.mxu0 0.0
    %1159 = vmatprep.subr.mxu0 0.0
    %1160 = vmatpush1.msra.mxu0 0.0
    %1161 = vmatprep.subr.mxu0 0.0
    %1162 = vmatpush1.msra.mxu0 0.0
    %1163 = vmatprep.subr.mxu0 0.0
    %1164 = vmatpush1.msra.mxu0 0.0
    %1165 = vmatprep.subr.mxu0 0.0
    %1166 = vmatpush1.msra.mxu0 0.0
    %1167 = vmatprep.subr.mxu0 0.0
    %1168 = vmatpush1.msra.mxu0 0.0
    %1169 = vmatprep.subr.mxu0 0.0
    %1170 = vmatpush1.msra.mxu0 0.0
    %1171 = vmatprep.subr.mxu0 0.0
    %1172 = vmatpush1.msra.mxu0 0.0
    %1173 = vmatprep.subr.mxu0 0.0
    %1174 = vmatpush1.msra.mxu0 0.0
    %1175 = vmatprep.subr.mxu0 0.0
    %1176 = vmatpush1.msra.mxu0 0.0
    %1177 = vmatprep.subr.mxu0 0.0
    %1178 = vmatpush1.msra.mxu0 0.0
    %1179 = vmatprep.subr.mxu0 0.0
    %1180 = vmatpush1.msra.mxu0 0.0
    %1181 = vmatprep.subr.mxu0 0.0
    %1182 = vmatpush1.msra.mxu0 0.0
    %1183 = vmatprep.subr.mxu0 0.0
    %1184 = vmatpush1.msra.mxu0 0.0
    %1185 = vmatprep.subr.mxu0 0.0
    %1186 = vmatpush1.msra.mxu0 0.0
    %1187 = vmatprep.subr.mxu0 0.0
    %1188 = vmatpush1.msra.mxu0 0.0
    %1189 = vmatprep.subr.mxu0 0.0
    %1190 = vmatpush1.msra.mxu0 0.0
    %1191 = vmatprep.mubr.f32.mxu0 0.0
    %1192 = vmatmul.mubr.f32.gmra.mrb[0].mxu0 %v1123
    %v1193 = vpop.f32.mrb[0].mxu0
    %v1194 = vadd.f32 %v1115, %v1193
    %v1195 = vpop.f32.mrb[0].mxu0
    %1196 = vmatprep.mubr.f32.mxu0 0.0
    %1197 = vmatmul.mubr.f32.gmra.mrb[0].mxu0 %v1125
    %v1198 = vpop.f32.mrb[0].mxu0
    %v1199 = vadd.f32 %v1115, %v1198
    %v1200 = vpop.f32.mrb[0].mxu0
    %1201 = vdwg.mxu0
    %v1202 = vld [vmem:[#allocation8] sm:$0xff]
    %v1203 = vld [vmem:[#allocation8 + $0x8] sm:$0xff]
    %v1204 = vld [vmem:[#allocation8 + $0x10] sm:$0xff]
    %v1205 = vld [vmem:[#allocation8 + $0x18] sm:$0xff]
    %s1206 = scalar_lea.vmem %s9, 2
    %v1207 = vld [vmem:[%s1206] sm:$0x3]
    %s1208 = scalar_lea.vmem %s10, 2
    %v1209 = vld [vmem:[%s1208] sm:$0x3]
    %v1211 = vsel %vm239, %v1207, 0
    %1213 = vmatprep.subr.mxu0 0.0
    %1214 = vmatpush1.msra.mxu0 %v1202
    %1215 = vmatprep.subr.mxu0 0.0
    %1216 = vmatpush1.msra.mxu0 %v1203
    %1217 = vmatprep.subr.mxu0 0.0
    %1218 = vmatpush1.msra.mxu0 %v1204
    %1219 = vmatprep.subr.mxu0 0.0
    %1220 = vmatpush1.msra.mxu0 %v1205
    %1221 = vmatprep.subr.mxu0 0.0
    %1222 = vmatpush1.msra.mxu0 0.0
    %1223 = vmatprep.subr.mxu0 0.0
    %1224 = vmatpush1.msra.mxu0 0.0
    %1225 = vmatprep.subr.mxu0 0.0
    %1226 = vmatpush1.msra.mxu0 0.0
    %1227 = vmatprep.subr.mxu0 0.0
    %1228 = vmatpush1.msra.mxu0 0.0
    %1229 = vmatprep.subr.mxu0 0.0
    %1230 = vmatpush1.msra.mxu0 0.0
    %1231 = vmatprep.subr.mxu0 0.0
    %1232 = vmatpush1.msra.mxu0 0.0
    %1233 = vmatprep.subr.mxu0 0.0
    %1234 = vmatpush1.msra.mxu0 0.0
    %1235 = vmatprep.subr.mxu0 0.0
    %1236 = vmatpush1.msra.mxu0 0.0
    %1237 = vmatprep.subr.mxu0 0.0
    %1238 = vmatpush1.msra.mxu0 0.0
    %1239 = vmatprep.subr.mxu0 0.0
    %1240 = vmatpush1.msra.mxu0 0.0
    %1241 = vmatprep.subr.mxu0 0.0
    %1242 = vmatpush1.msra.mxu0 0.0
    %1243 = vmatprep.subr.mxu0 0.0
    %1244 = vmatpush1.msra.mxu0 0.0
    %1245 = vmatprep.subr.mxu0 0.0
    %1246 = vmatpush1.msra.mxu0 0.0
    %1247 = vmatprep.subr.mxu0 0.0
    %1248 = vmatpush1.msra.mxu0 0.0
    %1249 = vmatprep.subr.mxu0 0.0
    %1250 = vmatpush1.msra.mxu0 0.0
    %1251 = vmatprep.subr.mxu0 0.0
    %1252 = vmatpush1.msra.mxu0 0.0
    %1253 = vmatprep.subr.mxu0 0.0
    %1254 = vmatpush1.msra.mxu0 0.0
    %1255 = vmatprep.subr.mxu0 0.0
    %1256 = vmatpush1.msra.mxu0 0.0
    %1257 = vmatprep.subr.mxu0 0.0
    %1258 = vmatpush1.msra.mxu0 0.0
    %1259 = vmatprep.subr.mxu0 0.0
    %1260 = vmatpush1.msra.mxu0 0.0
    %1261 = vmatprep.subr.mxu0 0.0
    %1262 = vmatpush1.msra.mxu0 0.0
    %1263 = vmatprep.subr.mxu0 0.0
    %1264 = vmatpush1.msra.mxu0 0.0
    %1265 = vmatprep.subr.mxu0 0.0
    %1266 = vmatpush1.msra.mxu0 0.0
    %1267 = vmatprep.subr.mxu0 0.0
    %1268 = vmatpush1.msra.mxu0 0.0
    %1269 = vmatprep.subr.mxu0 0.0
    %1270 = vmatpush1.msra.mxu0 0.0
    %1271 = vmatprep.subr.mxu0 0.0
    %1272 = vmatpush1.msra.mxu0 0.0
    %1273 = vmatprep.subr.mxu0 0.0
    %1274 = vmatpush1.msra.mxu0 0.0
    %1275 = vmatprep.subr.mxu0 0.0
    %1276 = vmatpush1.msra.mxu0 0.0
    %1277 = vmatprep.mubr.f32.mxu0 0.0
    %1278 = vmatmul.mubr.f32.gmra.mrb[0].mxu0 %v1211
    %v1279 = vpop.f32.mrb[0].mxu0
    %v1280 = vadd.f32 0.0, %v1279
    %v1281 = vpop.f32.mrb[0].mxu0
    %1282 = vdwg.mxu0
    %v1283 = vadd.f32 %v1194, %v1280
    %v1284 = vxor.u32 %v1283, 2147483648
    %v1285 = vmul.f32 %v1284, 1.442695
    %v1286 = vpow.pop %v1285
    %v1287 = vadd.f32 %v1286, 1.0
    %v1288 = vrcp.pop %v1287
    %v1289 = vmul.f32 1.0, %v1288
    %v1290 = vtanh.pop %v1283
    %1292 = vrot.lane.b32.xlu0 %v1209, 32
    %v1293 = vpop.permute.xlu0 %1292
    %v1295 = vmul.f32 %v1289, %v1293
    %1297 = vrot.lane.b32.xlu0 %v1290, 64
    %v1298 = vpop.permute.xlu0 %1297
    %v1300 = vmul.f32 %v1289, %v1298
    %1302 = vrot.lane.b32.xlu0 %v1300, 32
    %v1303 = vpop.permute.xlu0 %1302
    %v1305 = vadd.f32 %v1295, %v1303
    %v1306 = vtanh.pop %v1305
    %1308 = vrot.lane.b32.xlu0 %v1306, 64
    %v1309 = vpop.permute.xlu0 %1308
    %v1311 = vmul.f32 %v1289, %v1309
    %1313 = vrot.lane.b32.xlu0 %v1311, 32
    %v1314 = vpop.permute.xlu0 %1313
    %v1315 = vsel %vm239, %v1314, 0
    %1317 = vmatprep.subr.mxu0 0.0
    %1318 = vmatpush1.msra.mxu0 %v1202
    %1319 = vmatprep.subr.mxu0 0.0
    %1320 = vmatpush1.msra.mxu0 %v1203
    %1321 = vmatprep.subr.mxu0 0.0
    %1322 = vmatpush1.msra.mxu0 %v1204
    %1323 = vmatprep.subr.mxu0 0.0
    %1324 = vmatpush1.msra.mxu0 %v1205
    %1325 = vmatprep.subr.mxu0 0.0
    %1326 = vmatpush1.msra.mxu0 0.0
    %1327 = vmatprep.subr.mxu0 0.0
    %1328 = vmatpush1.msra.mxu0 0.0
    %1329 = vmatprep.subr.mxu0 0.0
    %1330 = vmatpush1.msra.mxu0 0.0
    %1331 = vmatprep.subr.mxu0 0.0
    %1332 = vmatpush1.msra.mxu0 0.0
    %1333 = vmatprep.subr.mxu0 0.0
    %1334 = vmatpush1.msra.mxu0 0.0
    %1335 = vmatprep.subr.mxu0 0.0
    %1336 = vmatpush1.msra.mxu0 0.0
    %1337 = vmatprep.subr.mxu0 0.0
    %1338 = vmatpush1.msra.mxu0 0.0
    %1339 = vmatprep.subr.mxu0 0.0
    %1340 = vmatpush1.msra.mxu0 0.0
    %1341 = vmatprep.subr.mxu0 0.0
    %1342 = vmatpush1.msra.mxu0 0.0
    %1343 = vmatprep.subr.mxu0 0.0
    %1344 = vmatpush1.msra.mxu0 0.0
    %1345 = vmatprep.subr.mxu0 0.0
    %1346 = vmatpush1.msra.mxu0 0.0
    %1347 = vmatprep.subr.mxu0 0.0
    %1348 = vmatpush1.msra.mxu0 0.0
    %1349 = vmatprep.subr.mxu0 0.0
    %1350 = vmatpush1.msra.mxu0 0.0
    %1351 = vmatprep.subr.mxu0 0.0
    %1352 = vmatpush1.msra.mxu0 0.0
    %1353 = vmatprep.subr.mxu0 0.0
    %1354 = vmatpush1.msra.mxu0 0.0
    %1355 = vmatprep.subr.mxu0 0.0
    %1356 = vmatpush1.msra.mxu0 0.0
    %1357 = vmatprep.subr.mxu0 0.0
    %1358 = vmatpush1.msra.mxu0 0.0
    %1359 = vmatprep.subr.mxu0 0.0
    %1360 = vmatpush1.msra.mxu0 0.0
    %1361 = vmatprep.subr.mxu0 0.0
    %1362 = vmatpush1.msra.mxu0 0.0
    %1363 = vmatprep.subr.mxu0 0.0
    %1364 = vmatpush1.msra.mxu0 0.0
    %1365 = vmatprep.subr.mxu0 0.0
    %1366 = vmatpush1.msra.mxu0 0.0
    %1367 = vmatprep.subr.mxu0 0.0
    %1368 = vmatpush1.msra.mxu0 0.0
    %1369 = vmatprep.subr.mxu0 0.0
    %1370 = vmatpush1.msra.mxu0 0.0
    %1371 = vmatprep.subr.mxu0 0.0
    %1372 = vmatpush1.msra.mxu0 0.0
    %1373 = vmatprep.subr.mxu0 0.0
    %1374 = vmatpush1.msra.mxu0 0.0
    %1375 = vmatprep.subr.mxu0 0.0
    %1376 = vmatpush1.msra.mxu0 0.0
    %1377 = vmatprep.subr.mxu0 0.0
    %1378 = vmatpush1.msra.mxu0 0.0
    %1379 = vmatprep.subr.mxu0 0.0
    %1380 = vmatpush1.msra.mxu0 0.0
    %1381 = vmatprep.mubr.f32.mxu0 0.0
    %1382 = vmatmul.mubr.f32.gmra.mrb[0].mxu0 %v1315
    %v1383 = vpop.f32.mrb[0].mxu0
    %v1384 = vadd.f32 0.0, %v1383
    %v1385 = vpop.f32.mrb[0].mxu0
    %1386 = vdwg.mxu0
    %v1388 = vrot.slane %v1384, 6
    %v1390 = vadd.f32 %v1194, %v1388
    %v1391 = vxor.u32 %v1390, 2147483648
    %v1392 = vmul.f32 %v1391, 1.442695
    %v1393 = vpow.pop %v1392
    %v1394 = vadd.f32 %v1393, 1.0
    %v1395 = vrcp.pop %v1394
    %v1396 = vmul.f32 1.0, %v1395
    %v1397 = vtanh.pop %v1390
    %v1399 = vrot.slane %v1305, 6
    %v1401 = vmul.f32 %v1396, %v1399
    %1403 = vrot.lane.b32.xlu0 %v1397, 64
    %v1404 = vpop.permute.xlu0 %1403
    %v1406 = vmul.f32 %v1396, %v1404
    %1408 = vrot.lane.b32.xlu0 %v1406, 32
    %v1409 = vpop.permute.xlu0 %1408
    %v1411 = vadd.f32 %v1401, %v1409
    %v1412 = vtanh.pop %v1411
    %1414 = vrot.lane.b32.xlu0 %v1412, 64
    %v1415 = vpop.permute.xlu0 %1414
    %v1417 = vmul.f32 %v1396, %v1415
    %v1419 = vrot.slane %v1417, 2
    %1420 = vrot.lane.b32.xlu0 %v1419, 32
    %v1421 = vpop.permute.xlu0 %1420
    %v1422 = vsel %vm239, %v1421, 0
    %1424 = vmatprep.subr.mxu0 0.0
    %1425 = vmatpush1.msra.mxu0 %v1202
    %1426 = vmatprep.subr.mxu0 0.0
    %1427 = vmatpush1.msra.mxu0 %v1203
    %1428 = vmatprep.subr.mxu0 0.0
    %1429 = vmatpush1.msra.mxu0 %v1204
    %1430 = vmatprep.subr.mxu0 0.0
    %1431 = vmatpush1.msra.mxu0 %v1205
    %1432 = vmatprep.subr.mxu0 0.0
    %1433 = vmatpush1.msra.mxu0 0.0
    %1434 = vmatprep.subr.mxu0 0.0
    %1435 = vmatpush1.msra.mxu0 0.0
    %1436 = vmatprep.subr.mxu0 0.0
    %1437 = vmatpush1.msra.mxu0 0.0
    %1438 = vmatprep.subr.mxu0 0.0
    %1439 = vmatpush1.msra.mxu0 0.0
    %1440 = vmatprep.subr.mxu0 0.0
    %1441 = vmatpush1.msra.mxu0 0.0
    %1442 = vmatprep.subr.mxu0 0.0
    %1443 = vmatpush1.msra.mxu0 0.0
    %1444 = vmatprep.subr.mxu0 0.0
    %1445 = vmatpush1.msra.mxu0 0.0
    %1446 = vmatprep.subr.mxu0 0.0
    %1447 = vmatpush1.msra.mxu0 0.0
    %1448 = vmatprep.subr.mxu0 0.0
    %1449 = vmatpush1.msra.mxu0 0.0
    %1450 = vmatprep.subr.mxu0 0.0
    %1451 = vmatpush1.msra.mxu0 0.0
    %1452 = vmatprep.subr.mxu0 0.0
    %1453 = vmatpush1.msra.mxu0 0.0
    %1454 = vmatprep.subr.mxu0 0.0
    %1455 = vmatpush1.msra.mxu0 0.0
    %1456 = vmatprep.subr.mxu0 0.0
    %1457 = vmatpush1.msra.mxu0 0.0
    %1458 = vmatprep.subr.mxu0 0.0
    %1459 = vmatpush1.msra.mxu0 0.0
    %1460 = vmatprep.subr.mxu0 0.0
    %1461 = vmatpush1.msra.mxu0 0.0
    %1462 = vmatprep.subr.mxu0 0.0
    %1463 = vmatpush1.msra.mxu0 0.0
    %1464 = vmatprep.subr.mxu0 0.0
    %1465 = vmatpush1.msra.mxu0 0.0
    %1466 = vmatprep.subr.mxu0 0.0
    %1467 = vmatpush1.msra.mxu0 0.0
    %1468 = vmatprep.subr.mxu0 0.0
    %1469 = vmatpush1.msra.mxu0 0.0
    %1470 = vmatprep.subr.mxu0 0.0
    %1471 = vmatpush1.msra.mxu0 0.0
    %1472 = vmatprep.subr.mxu0 0.0
    %1473 = vmatpush1.msra.mxu0 0.0
    %1474 = vmatprep.subr.mxu0 0.0
    %1475 = vmatpush1.msra.mxu0 0.0
    %1476 = vmatprep.subr.mxu0 0.0
    %1477 = vmatpush1.msra.mxu0 0.0
    %1478 = vmatprep.subr.mxu0 0.0
    %1479 = vmatpush1.msra.mxu0 0.0
    %1480 = vmatprep.subr.mxu0 0.0
    %1481 = vmatpush1.msra.mxu0 0.0
    %1482 = vmatprep.subr.mxu0 0.0
    %1483 = vmatpush1.msra.mxu0 0.0
    %1484 = vmatprep.subr.mxu0 0.0
    %1485 = vmatpush1.msra.mxu0 0.0
    %1486 = vmatprep.subr.mxu0 0.0
    %1487 = vmatpush1.msra.mxu0 0.0
    %1488 = vmatprep.mubr.f32.mxu0 0.0
    %1489 = vmatmul.mubr.f32.gmra.mrb[0].mxu0 %v1422
    %v1490 = vpop.f32.mrb[0].mxu0
    %v1491 = vadd.f32 0.0, %v1490
    %v1492 = vpop.f32.mrb[0].mxu0
    %1493 = vdwg.mxu0
    %v1495 = vrot.slane %v1491, 4
    %v1497 = vadd.f32 %v1194, %v1495
    %v1498 = vxor.u32 %v1497, 2147483648
    %v1499 = vmul.f32 %v1498, 1.442695
    %v1500 = vpow.pop %v1499
    %v1501 = vadd.f32 %v1500, 1.0
    %v1502 = vrcp.pop %v1501
    %v1503 = vmul.f32 1.0, %v1502
    %v1504 = vtanh.pop %v1497
    %v1506 = vrot.slane %v1411, 6
    %v1508 = vmul.f32 %v1503, %v1506
    %1510 = vrot.lane.b32.xlu0 %v1504, 64
    %v1511 = vpop.permute.xlu0 %1510
    %v1513 = vmul.f32 %v1503, %v1511
    %1515 = vrot.lane.b32.xlu0 %v1513, 32
    %v1516 = vpop.permute.xlu0 %1515
    %v1518 = vadd.f32 %v1508, %v1516
    %v1519 = vtanh.pop %v1518
    %1521 = vrot.lane.b32.xlu0 %v1519, 64
    %v1522 = vpop.permute.xlu0 %1521
    %v1524 = vmul.f32 %v1503, %v1522
    %v1526 = vrot.slane %v1524, 4
    %1527 = vrot.lane.b32.xlu0 %v1526, 32
    %v1528 = vpop.permute.xlu0 %1527
    %v1529 = vsel %vm239, %v1528, 0
    %1531 = vmatprep.subr.mxu0 0.0
    %1532 = vmatpush1.msra.mxu0 %v1202
    %1533 = vmatprep.subr.mxu0 0.0
    %1534 = vmatpush1.msra.mxu0 %v1203
    %1535 = vmatprep.subr.mxu0 0.0
    %1536 = vmatpush1.msra.mxu0 %v1204
    %1537 = vmatprep.subr.mxu0 0.0
    %1538 = vmatpush1.msra.mxu0 %v1205
    %1539 = vmatprep.subr.mxu0 0.0
    %1540 = vmatpush1.msra.mxu0 0.0
    %1541 = vmatprep.subr.mxu0 0.0
    %1542 = vmatpush1.msra.mxu0 0.0
    %1543 = vmatprep.subr.mxu0 0.0
    %1544 = vmatpush1.msra.mxu0 0.0
    %1545 = vmatprep.subr.mxu0 0.0
    %1546 = vmatpush1.msra.mxu0 0.0
    %1547 = vmatprep.subr.mxu0 0.0
    %1548 = vmatpush1.msra.mxu0 0.0
    %1549 = vmatprep.subr.mxu0 0.0
    %1550 = vmatpush1.msra.mxu0 0.0
    %1551 = vmatprep.subr.mxu0 0.0
    %1552 = vmatpush1.msra.mxu0 0.0
    %1553 = vmatprep.subr.mxu0 0.0
    %1554 = vmatpush1.msra.mxu0 0.0
    %1555 = vmatprep.subr.mxu0 0.0
    %1556 = vmatpush1.msra.mxu0 0.0
    %1557 = vmatprep.subr.mxu0 0.0
    %1558 = vmatpush1.msra.mxu0 0.0
    %1559 = vmatprep.subr.mxu0 0.0
    %1560 = vmatpush1.msra.mxu0 0.0
    %1561 = vmatprep.subr.mxu0 0.0
    %1562 = vmatpush1.msra.mxu0 0.0
    %1563 = vmatprep.subr.mxu0 0.0
    %1564 = vmatpush1.msra.mxu0 0.0
    %1565 = vmatprep.subr.mxu0 0.0
    %1566 = vmatpush1.msra.mxu0 0.0
    %1567 = vmatprep.subr.mxu0 0.0
    %1568 = vmatpush1.msra.mxu0 0.0
    %1569 = vmatprep.subr.mxu0 0.0
    %1570 = vmatpush1.msra.mxu0 0.0
    %1571 = vmatprep.subr.mxu0 0.0
    %1572 = vmatpush1.msra.mxu0 0.0
    %1573 = vmatprep.subr.mxu0 0.0
    %1574 = vmatpush1.msra.mxu0 0.0
    %1575 = vmatprep.subr.mxu0 0.0
    %1576 = vmatpush1.msra.mxu0 0.0
    %1577 = vmatprep.subr.mxu0 0.0
    %1578 = vmatpush1.msra.mxu0 0.0
    %1579 = vmatprep.subr.mxu0 0.0
    %1580 = vmatpush1.msra.mxu0 0.0
    %1581 = vmatprep.subr.mxu0 0.0
    %1582 = vmatpush1.msra.mxu0 0.0
    %1583 = vmatprep.subr.mxu0 0.0
    %1584 = vmatpush1.msra.mxu0 0.0
    %1585 = vmatprep.subr.mxu0 0.0
    %1586 = vmatpush1.msra.mxu0 0.0
    %1587 = vmatprep.subr.mxu0 0.0
    %1588 = vmatpush1.msra.mxu0 0.0
    %1589 = vmatprep.subr.mxu0 0.0
    %1590 = vmatpush1.msra.mxu0 0.0
    %1591 = vmatprep.subr.mxu0 0.0
    %1592 = vmatpush1.msra.mxu0 0.0
    %1593 = vmatprep.subr.mxu0 0.0
    %1594 = vmatpush1.msra.mxu0 0.0
    %1595 = vmatprep.mubr.f32.mxu0 0.0
    %1596 = vmatmul.mubr.f32.gmra.mrb[0].mxu0 %v1529
    %v1597 = vpop.f32.mrb[0].mxu0
    %v1598 = vadd.f32 0.0, %v1597
    %v1599 = vpop.f32.mrb[0].mxu0
    %1600 = vdwg.mxu0
    %v1602 = vrot.slane %v1598, 2
    %v1604 = vadd.f32 %v1194, %v1602
    %v1605 = vxor.u32 %v1604, 2147483648
    %v1606 = vmul.f32 %v1605, 1.442695
    %v1607 = vpow.pop %v1606
    %v1608 = vadd.f32 %v1607, 1.0
    %v1609 = vrcp.pop %v1608
    %v1610 = vmul.f32 1.0, %v1609
    %v1611 = vtanh.pop %v1604
    %v1613 = vrot.slane %v1518, 6
    %v1615 = vmul.f32 %v1610, %v1613
    %1617 = vrot.lane.b32.xlu0 %v1611, 64
    %v1618 = vpop.permute.xlu0 %1617
    %v1620 = vmul.f32 %v1610, %v1618
    %1622 = vrot.lane.b32.xlu0 %v1620, 32
    %v1623 = vpop.permute.xlu0 %1622
    %v1625 = vadd.f32 %v1615, %v1623
    %v1626 = vtanh.pop %v1625
    %1628 = vrot.lane.b32.xlu0 %v1626, 64
    %v1629 = vpop.permute.xlu0 %1628
    %v1631 = vmul.f32 %v1610, %v1629
    %v1633 = vrot.slane %v1631, 6
    %1634 = vrot.lane.b32.xlu0 %v1633, 32
    %v1635 = vpop.permute.xlu0 %1634
    %v1636 = vsel %vm239, %v1635, 0
    %1638 = vmatprep.subr.mxu0 0.0
    %1639 = vmatpush1.msra.mxu0 %v1202
    %1640 = vmatprep.subr.mxu0 0.0
    %1641 = vmatpush1.msra.mxu0 %v1203
    %1642 = vmatprep.subr.mxu0 0.0
    %1643 = vmatpush1.msra.mxu0 %v1204
    %1644 = vmatprep.subr.mxu0 0.0
    %1645 = vmatpush1.msra.mxu0 %v1205
    %1646 = vmatprep.subr.mxu0 0.0
    %1647 = vmatpush1.msra.mxu0 0.0
    %1648 = vmatprep.subr.mxu0 0.0
    %1649 = vmatpush1.msra.mxu0 0.0
    %1650 = vmatprep.subr.mxu0 0.0
    %1651 = vmatpush1.msra.mxu0 0.0
    %1652 = vmatprep.subr.mxu0 0.0
    %1653 = vmatpush1.msra.mxu0 0.0
    %1654 = vmatprep.subr.mxu0 0.0
    %1655 = vmatpush1.msra.mxu0 0.0
    %1656 = vmatprep.subr.mxu0 0.0
    %1657 = vmatpush1.msra.mxu0 0.0
    %1658 = vmatprep.subr.mxu0 0.0
    %1659 = vmatpush1.msra.mxu0 0.0
    %1660 = vmatprep.subr.mxu0 0.0
    %1661 = vmatpush1.msra.mxu0 0.0
    %1662 = vmatprep.subr.mxu0 0.0
    %1663 = vmatpush1.msra.mxu0 0.0
    %1664 = vmatprep.subr.mxu0 0.0
    %1665 = vmatpush1.msra.mxu0 0.0
    %1666 = vmatprep.subr.mxu0 0.0
    %1667 = vmatpush1.msra.mxu0 0.0
    %1668 = vmatprep.subr.mxu0 0.0
    %1669 = vmatpush1.msra.mxu0 0.0
    %1670 = vmatprep.subr.mxu0 0.0
    %1671 = vmatpush1.msra.mxu0 0.0
    %1672 = vmatprep.subr.mxu0 0.0
    %1673 = vmatpush1.msra.mxu0 0.0
    %1674 = vmatprep.subr.mxu0 0.0
    %1675 = vmatpush1.msra.mxu0 0.0
    %1676 = vmatprep.subr.mxu0 0.0
    %1677 = vmatpush1.msra.mxu0 0.0
    %1678 = vmatprep.subr.mxu0 0.0
    %1679 = vmatpush1.msra.mxu0 0.0
    %1680 = vmatprep.subr.mxu0 0.0
    %1681 = vmatpush1.msra.mxu0 0.0
    %1682 = vmatprep.subr.mxu0 0.0
    %1683 = vmatpush1.msra.mxu0 0.0
    %1684 = vmatprep.subr.mxu0 0.0
    %1685 = vmatpush1.msra.mxu0 0.0
    %1686 = vmatprep.subr.mxu0 0.0
    %1687 = vmatpush1.msra.mxu0 0.0
    %1688 = vmatprep.subr.mxu0 0.0
    %1689 = vmatpush1.msra.mxu0 0.0
    %1690 = vmatprep.subr.mxu0 0.0
    %1691 = vmatpush1.msra.mxu0 0.0
    %1692 = vmatprep.subr.mxu0 0.0
    %1693 = vmatpush1.msra.mxu0 0.0
    %1694 = vmatprep.subr.mxu0 0.0
    %1695 = vmatpush1.msra.mxu0 0.0
    %1696 = vmatprep.subr.mxu0 0.0
    %1697 = vmatpush1.msra.mxu0 0.0
    %1698 = vmatprep.subr.mxu0 0.0
    %1699 = vmatpush1.msra.mxu0 0.0
    %1700 = vmatprep.subr.mxu0 0.0
    %1701 = vmatpush1.msra.mxu0 0.0
    %1702 = vmatprep.mubr.f32.mxu0 0.0
    %1703 = vmatmul.mubr.f32.gmra.mrb[0].mxu0 %v1636
    %v1704 = vpop.f32.mrb[0].mxu0
    %v1705 = vadd.f32 0.0, %v1704
    %v1706 = vpop.f32.mrb[0].mxu0
    %1707 = vdwg.mxu0
    %v1708 = vadd.f32 %v1199, %v1705
    %v1709 = vxor.u32 %v1708, 2147483648
    %v1710 = vmul.f32 %v1709, 1.442695
    %v1711 = vpow.pop %v1710
    %v1712 = vadd.f32 %v1711, 1.0
    %v1713 = vrcp.pop %v1712
    %v1714 = vmul.f32 1.0, %v1713
    %v1715 = vtanh.pop %v1708
    %v1717 = vrot.slane %v1625, 6
    %v1719 = vmul.f32 %v1714, %v1717
    %1721 = vrot.lane.b32.xlu0 %v1715, 64
    %v1722 = vpop.permute.xlu0 %1721
    %v1724 = vmul.f32 %v1714, %v1722
    %1726 = vrot.lane.b32.xlu0 %v1724, 32
    %v1727 = vpop.permute.xlu0 %1726
    %v1729 = vadd.f32 %v1719, %v1727
    %v1730 = vtanh.pop %v1729
    %1732 = vrot.lane.b32.xlu0 %v1730, 64
    %v1733 = vpop.permute.xlu0 %1732
    %v1735 = vmul.f32 %v1714, %v1733
    %1737 = vrot.lane.b32.xlu0 %v1735, 32
    %v1738 = vpop.permute.xlu0 %1737
    %v1739 = vsel %vm239, %v1738, 0
    %1741 = vmatprep.subr.mxu0 0.0
    %1742 = vmatpush1.msra.mxu0 %v1202
    %1743 = vmatprep.subr.mxu0 0.0
    %1744 = vmatpush1.msra.mxu0 %v1203
    %1745 = vmatprep.subr.mxu0 0.0
    %1746 = vmatpush1.msra.mxu0 %v1204
    %1747 = vmatprep.subr.mxu0 0.0
    %1748 = vmatpush1.msra.mxu0 %v1205
    %1749 = vmatprep.subr.mxu0 0.0
    %1750 = vmatpush1.msra.mxu0 0.0
    %1751 = vmatprep.subr.mxu0 0.0
    %1752 = vmatpush1.msra.mxu0 0.0
    %1753 = vmatprep.subr.mxu0 0.0
    %1754 = vmatpush1.msra.mxu0 0.0
    %1755 = vmatprep.subr.mxu0 0.0
    %1756 = vmatpush1.msra.mxu0 0.0
    %1757 = vmatprep.subr.mxu0 0.0
    %1758 = vmatpush1.msra.mxu0 0.0
    %1759 = vmatprep.subr.mxu0 0.0
    %1760 = vmatpush1.msra.mxu0 0.0
    %1761 = vmatprep.subr.mxu0 0.0
    %1762 = vmatpush1.msra.mxu0 0.0
    %1763 = vmatprep.subr.mxu0 0.0
    %1764 = vmatpush1.msra.mxu0 0.0
    %1765 = vmatprep.subr.mxu0 0.0
    %1766 = vmatpush1.msra.mxu0 0.0
    %1767 = vmatprep.subr.mxu0 0.0
    %1768 = vmatpush1.msra.mxu0 0.0
    %1769 = vmatprep.subr.mxu0 0.0
    %1770 = vmatpush1.msra.mxu0 0.0
    %1771 = vmatprep.subr.mxu0 0.0
    %1772 = vmatpush1.msra.mxu0 0.0
    %1773 = vmatprep.subr.mxu0 0.0
    %1774 = vmatpush1.msra.mxu0 0.0
    %1775 = vmatprep.subr.mxu0 0.0
    %1776 = vmatpush1.msra.mxu0 0.0
    %1777 = vmatprep.subr.mxu0 0.0
    %1778 = vmatpush1.msra.mxu0 0.0
    %1779 = vmatprep.subr.mxu0 0.0
    %1780 = vmatpush1.msra.mxu0 0.0
    %1781 = vmatprep.subr.mxu0 0.0
    %1782 = vmatpush1.msra.mxu0 0.0
    %1783 = vmatprep.subr.mxu0 0.0
    %1784 = vmatpush1.msra.mxu0 0.0
    %1785 = vmatprep.subr.mxu0 0.0
    %1786 = vmatpush1.msra.mxu0 0.0
    %1787 = vmatprep.subr.mxu0 0.0
    %1788 = vmatpush1.msra.mxu0 0.0
    %1789 = vmatprep.subr.mxu0 0.0
    %1790 = vmatpush1.msra.mxu0 0.0
    %1791 = vmatprep.subr.mxu0 0.0
    %1792 = vmatpush1.msra.mxu0 0.0
    %1793 = vmatprep.subr.mxu0 0.0
    %1794 = vmatpush1.msra.mxu0 0.0
    %1795 = vmatprep.subr.mxu0 0.0
    %1796 = vmatpush1.msra.mxu0 0.0
    %1797 = vmatprep.subr.mxu0 0.0
    %1798 = vmatpush1.msra.mxu0 0.0
    %1799 = vmatprep.subr.mxu0 0.0
    %1800 = vmatpush1.msra.mxu0 0.0
    %1801 = vmatprep.subr.mxu0 0.0
    %1802 = vmatpush1.msra.mxu0 0.0
    %1803 = vmatprep.subr.mxu0 0.0
    %1804 = vmatpush1.msra.mxu0 0.0
    %1805 = vmatprep.mubr.f32.mxu0 0.0
    %1806 = vmatmul.mubr.f32.gmra.mrb[0].mxu0 %v1739
    %v1807 = vpop.f32.mrb[0].mxu0
    %v1808 = vadd.f32 0.0, %v1807
    %v1809 = vpop.f32.mrb[0].mxu0
    %1810 = vdwg.mxu0
    %v1812 = vrot.slane %v1808, 6
    %v1814 = vadd.f32 %v1199, %v1812
    %v1815 = vxor.u32 %v1814, 2147483648
    %v1816 = vmul.f32 %v1815, 1.442695
    %v1817 = vpow.pop %v1816
    %v1818 = vadd.f32 %v1817, 1.0
    %v1819 = vrcp.pop %v1818
    %v1820 = vmul.f32 1.0, %v1819
    %v1821 = vtanh.pop %v1814
    %v1823 = vrot.slane %v1729, 6
    %v1825 = vmul.f32 %v1820, %v1823
    %1827 = vrot.lane.b32.xlu0 %v1821, 64
    %v1828 = vpop.permute.xlu0 %1827
    %v1830 = vmul.f32 %v1820, %v1828
    %1832 = vrot.lane.b32.xlu0 %v1830, 32
    %v1833 = vpop.permute.xlu0 %1832
    %v1835 = vadd.f32 %v1825, %v1833
    %v1836 = vtanh.pop %v1835
    %1838 = vrot.lane.b32.xlu0 %v1836, 64
    %v1839 = vpop.permute.xlu0 %1838
    %v1841 = vmul.f32 %v1820, %v1839
    %v1843 = vrot.slane %v1841, 2
    %1844 = vrot.lane.b32.xlu0 %v1843, 32
    %v1845 = vpop.permute.xlu0 %1844
    %v1846 = vsel %vm239, %v1845, 0
    %1848 = vmatprep.subr.mxu0 0.0
    %1849 = vmatpush1.msra.mxu0 %v1202
    %1850 = vmatprep.subr.mxu0 0.0
    %1851 = vmatpush1.msra.mxu0 %v1203
    %1852 = vmatprep.subr.mxu0 0.0
    %1853 = vmatpush1.msra.mxu0 %v1204
    %1854 = vmatprep.subr.mxu0 0.0
    %1855 = vmatpush1.msra.mxu0 %v1205
    %1856 = vmatprep.subr.mxu0 0.0
    %1857 = vmatpush1.msra.mxu0 0.0
    %1858 = vmatprep.subr.mxu0 0.0
    %1859 = vmatpush1.msra.mxu0 0.0
    %1860 = vmatprep.subr.mxu0 0.0
    %1861 = vmatpush1.msra.mxu0 0.0
    %1862 = vmatprep.subr.mxu0 0.0
    %1863 = vmatpush1.msra.mxu0 0.0
    %1864 = vmatprep.subr.mxu0 0.0
    %1865 = vmatpush1.msra.mxu0 0.0
    %1866 = vmatprep.subr.mxu0 0.0
    %1867 = vmatpush1.msra.mxu0 0.0
    %1868 = vmatprep.subr.mxu0 0.0
    %1869 = vmatpush1.msra.mxu0 0.0
    %1870 = vmatprep.subr.mxu0 0.0
    %1871 = vmatpush1.msra.mxu0 0.0
    %1872 = vmatprep.subr.mxu0 0.0
    %1873 = vmatpush1.msra.mxu0 0.0
    %1874 = vmatprep.subr.mxu0 0.0
    %1875 = vmatpush1.msra.mxu0 0.0
    %1876 = vmatprep.subr.mxu0 0.0
    %1877 = vmatpush1.msra.mxu0 0.0
    %1878 = vmatprep.subr.mxu0 0.0
    %1879 = vmatpush1.msra.mxu0 0.0
    %1880 = vmatprep.subr.mxu0 0.0
    %1881 = vmatpush1.msra.mxu0 0.0
    %1882 = vmatprep.subr.mxu0 0.0
    %1883 = vmatpush1.msra.mxu0 0.0
    %1884 = vmatprep.subr.mxu0 0.0
    %1885 = vmatpush1.msra.mxu0 0.0
    %1886 = vmatprep.subr.mxu0 0.0
    %1887 = vmatpush1.msra.mxu0 0.0
    %1888 = vmatprep.subr.mxu0 0.0
    %1889 = vmatpush1.msra.mxu0 0.0
    %1890 = vmatprep.subr.mxu0 0.0
    %1891 = vmatpush1.msra.mxu0 0.0
    %1892 = vmatprep.subr.mxu0 0.0
    %1893 = vmatpush1.msra.mxu0 0.0
    %1894 = vmatprep.subr.mxu0 0.0
    %1895 = vmatpush1.msra.mxu0 0.0
    %1896 = vmatprep.subr.mxu0 0.0
    %1897 = vmatpush1.msra.mxu0 0.0
    %1898 = vmatprep.subr.mxu0 0.0
    %1899 = vmatpush1.msra.mxu0 0.0
    %1900 = vmatprep.subr.mxu0 0.0
    %1901 = vmatpush1.msra.mxu0 0.0
    %1902 = vmatprep.subr.mxu0 0.0
    %1903 = vmatpush1.msra.mxu0 0.0
    %1904 = vmatprep.subr.mxu0 0.0
    %1905 = vmatpush1.msra.mxu0 0.0
    %1906 = vmatprep.subr.mxu0 0.0
    %1907 = vmatpush1.msra.mxu0 0.0
    %1908 = vmatprep.subr.mxu0 0.0
    %1909 = vmatpush1.msra.mxu0 0.0
    %1910 = vmatprep.subr.mxu0 0.0
    %1911 = vmatpush1.msra.mxu0 0.0
    %1912 = vmatprep.mubr.f32.mxu0 0.0
    %1913 = vmatmul.mubr.f32.gmra.mrb[0].mxu0 %v1846
    %v1914 = vpop.f32.mrb[0].mxu0
    %v1915 = vadd.f32 0.0, %v1914
    %v1916 = vpop.f32.mrb[0].mxu0
    %1917 = vdwg.mxu0
    %v1919 = vrot.slane %v1915, 4
    %v1921 = vadd.f32 %v1199, %v1919
    %v1922 = vxor.u32 %v1921, 2147483648
    %v1923 = vmul.f32 %v1922, 1.442695
    %v1924 = vpow.pop %v1923
    %v1925 = vadd.f32 %v1924, 1.0
    %v1926 = vrcp.pop %v1925
    %v1927 = vmul.f32 1.0, %v1926
    %v1928 = vtanh.pop %v1921
    %v1930 = vrot.slane %v1835, 6
    %v1932 = vmul.f32 %v1927, %v1930
    %1934 = vrot.lane.b32.xlu0 %v1928, 64
    %v1935 = vpop.permute.xlu0 %1934
    %v1937 = vmul.f32 %v1927, %v1935
    %1939 = vrot.lane.b32.xlu0 %v1937, 32
    %v1940 = vpop.permute.xlu0 %1939
    %v1942 = vadd.f32 %v1932, %v1940
    %v1943 = vtanh.pop %v1942
    %1945 = vrot.lane.b32.xlu0 %v1943, 64
    %v1946 = vpop.permute.xlu0 %1945
    %v1948 = vmul.f32 %v1927, %v1946
    %v1950 = vrot.slane %v1948, 4
    %1951 = vrot.lane.b32.xlu0 %v1950, 32
    %v1952 = vpop.permute.xlu0 %1951
    %v1953 = vsel %vm239, %v1952, 0
    %1955 = vmatprep.subr.mxu0 0.0
    %1956 = vmatpush1.msra.mxu0 %v1202
    %1957 = vmatprep.subr.mxu0 0.0
    %1958 = vmatpush1.msra.mxu0 %v1203
    %1959 = vmatprep.subr.mxu0 0.0
    %1960 = vmatpush1.msra.mxu0 %v1204
    %1961 = vmatprep.subr.mxu0 0.0
    %1962 = vmatpush1.msra.mxu0 %v1205
    %1963 = vmatprep.subr.mxu0 0.0
    %1964 = vmatpush1.msra.mxu0 0.0
    %1965 = vmatprep.subr.mxu0 0.0
    %1966 = vmatpush1.msra.mxu0 0.0
    %1967 = vmatprep.subr.mxu0 0.0
    %1968 = vmatpush1.msra.mxu0 0.0
    %1969 = vmatprep.subr.mxu0 0.0
    %1970 = vmatpush1.msra.mxu0 0.0
    %1971 = vmatprep.subr.mxu0 0.0
    %1972 = vmatpush1.msra.mxu0 0.0
    %1973 = vmatprep.subr.mxu0 0.0
    %1974 = vmatpush1.msra.mxu0 0.0
    %1975 = vmatprep.subr.mxu0 0.0
    %1976 = vmatpush1.msra.mxu0 0.0
    %1977 = vmatprep.subr.mxu0 0.0
    %1978 = vmatpush1.msra.mxu0 0.0
    %1979 = vmatprep.subr.mxu0 0.0
    %1980 = vmatpush1.msra.mxu0 0.0
    %1981 = vmatprep.subr.mxu0 0.0
    %1982 = vmatpush1.msra.mxu0 0.0
    %1983 = vmatprep.subr.mxu0 0.0
    %1984 = vmatpush1.msra.mxu0 0.0
    %1985 = vmatprep.subr.mxu0 0.0
    %1986 = vmatpush1.msra.mxu0 0.0
    %1987 = vmatprep.subr.mxu0 0.0
    %1988 = vmatpush1.msra.mxu0 0.0
    %1989 = vmatprep.subr.mxu0 0.0
    %1990 = vmatpush1.msra.mxu0 0.0
    %1991 = vmatprep.subr.mxu0 0.0
    %1992 = vmatpush1.msra.mxu0 0.0
    %1993 = vmatprep.subr.mxu0 0.0
    %1994 = vmatpush1.msra.mxu0 0.0
    %1995 = vmatprep.subr.mxu0 0.0
    %1996 = vmatpush1.msra.mxu0 0.0
    %1997 = vmatprep.subr.mxu0 0.0
    %1998 = vmatpush1.msra.mxu0 0.0
    %1999 = vmatprep.subr.mxu0 0.0
    %2000 = vmatpush1.msra.mxu0 0.0
    %2001 = vmatprep.subr.mxu0 0.0
    %2002 = vmatpush1.msra.mxu0 0.0
    %2003 = vmatprep.subr.mxu0 0.0
    %2004 = vmatpush1.msra.mxu0 0.0
    %2005 = vmatprep.subr.mxu0 0.0
    %2006 = vmatpush1.msra.mxu0 0.0
    %2007 = vmatprep.subr.mxu0 0.0
    %2008 = vmatpush1.msra.mxu0 0.0
    %2009 = vmatprep.subr.mxu0 0.0
    %2010 = vmatpush1.msra.mxu0 0.0
    %2011 = vmatprep.subr.mxu0 0.0
    %2012 = vmatpush1.msra.mxu0 0.0
    %2013 = vmatprep.subr.mxu0 0.0
    %2014 = vmatpush1.msra.mxu0 0.0
    %2015 = vmatprep.subr.mxu0 0.0
    %2016 = vmatpush1.msra.mxu0 0.0
    %2017 = vmatprep.subr.mxu0 0.0
    %2018 = vmatpush1.msra.mxu0 0.0
    %2019 = vmatprep.mubr.f32.mxu0 0.0
    %2020 = vmatmul.mubr.f32.gmra.mrb[0].mxu0 %v1953
    %v2021 = vpop.f32.mrb[0].mxu0
    %v2022 = vadd.f32 0.0, %v2021
    %v2023 = vpop.f32.mrb[0].mxu0
    %2024 = vdwg.mxu0
    %v2026 = vrot.slane %v2022, 2
    %v2028 = vadd.f32 %v1199, %v2026
    %v2029 = vxor.u32 %v2028, 2147483648
    %v2030 = vmul.f32 %v2029, 1.442695
    %v2031 = vpow.pop %v2030
    %v2032 = vadd.f32 %v2031, 1.0
    %v2033 = vrcp.pop %v2032
    %v2034 = vmul.f32 1.0, %v2033
    %v2035 = vtanh.pop %v2028
    %v2037 = vrot.slane %v1942, 6
    %v2039 = vmul.f32 %v2034, %v2037
    %2041 = vrot.lane.b32.xlu0 %v2035, 64
    %v2042 = vpop.permute.xlu0 %2041
    %v2044 = vmul.f32 %v2034, %v2042
    %2046 = vrot.lane.b32.xlu0 %v2044, 32
    %v2047 = vpop.permute.xlu0 %2046
    %v2049 = vadd.f32 %v2039, %v2047
    %v2050 = vtanh.pop %v2049
    %2052 = vrot.lane.b32.xlu0 %v2050, 64
    %v2053 = vpop.permute.xlu0 %2052
    %v2055 = vmul.f32 %v2034, %v2053
    %2057 = vrot.lane.b32.xlu0 %v2055, 32
    %v2058 = vpop.permute.xlu0 %2057
    %s2060 = scalar_lea.vmem [#allocation13], 2
    %2061 = vst.msk [vmem:[%s2060 - $0x6] sm:$0xc0] %vm1090, %v2058
    %2063 = vrot.lane.b32.xlu0 %v2049, 96
    %v2064 = vpop.permute.xlu0 %2063
    %s2066 = scalar_lea.vmem [#allocation14], 2
    %2067 = vst.msk [vmem:[%s2066 - $0x6] sm:$0xc0] %vm1090, %v2064
    %v2068 = vsel %vm1097, %v1311, %v1417
    %v2069 = vsel %vm1099, %v2068, %v1524
    %v2070 = vsel %vm1101, %v2069, %v1631
    %v2071 = vsel %vm1097, %v1735, %v1841
    %v2072 = vsel %vm1099, %v2071, %v1948
    %v2073 = vsel %vm1101, %v2072, %v2055
    %v2074 = vld [vmem:[%s7] sm:$0xff]
    %v2075 = vld [vmem:[%s7 + $0x8] sm:$0xff]
    %v2076 = vld [vmem:[%s7 + $0x10] sm:$0xff]
    %v2077 = vld [vmem:[%s7 + $0x18] sm:$0xff]
    %v2078 = vld [vmem:[#allocation11] sm:$0x1]
    %v2080 = vlaneseq
    %v2081 = vshrl.u32 %v2080, 7
    %v2082 = vsub.s32 0, %v2081
    %v2083 = vrot.slane %v2078, %v2082
    %2087 = vrot.lane.b32.xlu0 %v2070, 32
    %v2088 = vpop.permute.xlu0 %2087
    %2089 = vrot.lane.b32.xlu0 %v2073, 32
    %v2090 = vpop.permute.xlu0 %2089
    %v2091 = vsel %vm239, %v2088, 0
    %v2093 = vsel %vm239, %v2090, 0
    %2095 = vmatprep.subr.mxu0 0.0
    %2096 = vmatpush1.msra.mxu0 %v2074
    %2097 = vmatprep.subr.mxu0 0.0
    %2098 = vmatpush1.msra.mxu0 %v2075
    %2099 = vmatprep.subr.mxu0 0.0
    %2100 = vmatpush1.msra.mxu0 %v2076
    %2101 = vmatprep.subr.mxu0 0.0
    %2102 = vmatpush1.msra.mxu0 %v2077
    %2103 = vmatprep.subr.mxu0 0.0
    %2104 = vmatpush1.msra.mxu0 0.0
    %2105 = vmatprep.subr.mxu0 0.0
    %2106 = vmatpush1.msra.mxu0 0.0
    %2107 = vmatprep.subr.mxu0 0.0
    %2108 = vmatpush1.msra.mxu0 0.0
    %2109 = vmatprep.subr.mxu0 0.0
    %2110 = vmatpush1.msra.mxu0 0.0
    %2111 = vmatprep.subr.mxu0 0.0
    %2112 = vmatpush1.msra.mxu0 0.0
    %2113 = vmatprep.subr.mxu0 0.0
    %2114 = vmatpush1.msra.mxu0 0.0
    %2115 = vmatprep.subr.mxu0 0.0
    %2116 = vmatpush1.msra.mxu0 0.0
    %2117 = vmatprep.subr.mxu0 0.0
    %2118 = vmatpush1.msra.mxu0 0.0
    %2119 = vmatprep.subr.mxu0 0.0
    %2120 = vmatpush1.msra.mxu0 0.0
    %2121 = vmatprep.subr.mxu0 0.0
    %2122 = vmatpush1.msra.mxu0 0.0
    %2123 = vmatprep.subr.mxu0 0.0
    %2124 = vmatpush1.msra.mxu0 0.0
    %2125 = vmatprep.subr.mxu0 0.0
    %2126 = vmatpush1.msra.mxu0 0.0
    %2127 = vmatprep.subr.mxu0 0.0
    %2128 = vmatpush1.msra.mxu0 0.0
    %2129 = vmatprep.subr.mxu0 0.0
    %2130 = vmatpush1.msra.mxu0 0.0
    %2131 = vmatprep.subr.mxu0 0.0
    %2132 = vmatpush1.msra.mxu0 0.0
    %2133 = vmatprep.subr.mxu0 0.0
    %2134 = vmatpush1.msra.mxu0 0.0
    %2135 = vmatprep.subr.mxu0 0.0
    %2136 = vmatpush1.msra.mxu0 0.0
    %2137 = vmatprep.subr.mxu0 0.0
    %2138 = vmatpush1.msra.mxu0 0.0
    %2139 = vmatprep.subr.mxu0 0.0
    %2140 = vmatpush1.msra.mxu0 0.0
    %2141 = vmatprep.subr.mxu0 0.0
    %2142 = vmatpush1.msra.mxu0 0.0
    %2143 = vmatprep.subr.mxu0 0.0
    %2144 = vmatpush1.msra.mxu0 0.0
    %2145 = vmatprep.subr.mxu0 0.0
    %2146 = vmatpush1.msra.mxu0 0.0
    %2147 = vmatprep.subr.mxu0 0.0
    %2148 = vmatpush1.msra.mxu0 0.0
    %2149 = vmatprep.subr.mxu0 0.0
    %2150 = vmatpush1.msra.mxu0 0.0
    %2151 = vmatprep.subr.mxu0 0.0
    %2152 = vmatpush1.msra.mxu0 0.0
    %2153 = vmatprep.subr.mxu0 0.0
    %2154 = vmatpush1.msra.mxu0 0.0
    %2155 = vmatprep.subr.mxu0 0.0
    %2156 = vmatpush1.msra.mxu0 0.0
    %2157 = vmatprep.subr.mxu0 0.0
    %2158 = vmatpush1.msra.mxu0 0.0
    %2159 = vmatprep.mubr.f32.mxu0 0.0
    %2160 = vmatmul.mubr.f32.gmra.mrb[0].mxu0 %v2091
    %v2161 = vpop.f32.mrb[0].mxu0
    %v2162 = vadd.f32 %v2083, %v2161
    %v2163 = vpop.f32.mrb[0].mxu0
    %2164 = vmatprep.mubr.f32.mxu0 0.0
    %2165 = vmatmul.mubr.f32.gmra.mrb[0].mxu0 %v2093
    %v2166 = vpop.f32.mrb[0].mxu0
    %v2167 = vadd.f32 %v2083, %v2166
    %v2168 = vpop.f32.mrb[0].mxu0
    %2169 = vdwg.mxu0
    %2170 = vst [vmem:[%s11] sm:$0xff] %v2162
    %2171 = vst [vmem:[%s11 + $0x8] sm:$0xff] %v2167
    // Predicated region
    $region70: #{lstm_encoder_forward.1} parent=1 // pred_check
      _
    $region71: #{lstm_encoder_forward.1} parent=1 // pred_check_branch
      %2173 = sbr.rel (0) target = $region73
    $region72: #{lstm_encoder_forward.1} parent=1 // pred_region
      _
    $region73: #{lstm_encoder_forward.1} parent=1 // pred_fallthru
      _
    // Predicated region
    $region74: #{lstm_encoder_forward.1} parent=1 // pred_check
      _
    $region75: #{lstm_encoder_forward.1} parent=1 // pred_check_branch
      %2175 = sbr.rel (0) target = $region77
    $region76: #{lstm_encoder_forward.1} parent=1 // pred_region
      %s2177 = ssub.s32 64, 64
      %2178 = vsyncadd [#allocation4], %s2177
      %s2179 = sshll.u32 [#allocation13], 4
      %s2180 = int_to_ptr.vmem [resolvable:$true] %s2179
      %2185 = dma.vmem_to_hbm [thread:$0]  %s2180, 64, %s12, [#allocation4], 32, 32, 2
    $region77: #{lstm_encoder_forward.1} parent=1 // pred_fallthru
      _
    // Predicated region
    $region78: #{lstm_encoder_forward.1} parent=1 // pred_check
      _
    $region79: #{lstm_encoder_forward.1} parent=1 // pred_check_branch
      %2187 = sbr.rel (0) target = $region81
    $region80: #{lstm_encoder_forward.1} parent=1 // pred_region
      %s2189 = ssub.s32 64, 64
      %2190 = vsyncadd [#allocation15], %s2189
      %s2191 = sshll.u32 [#allocation14], 4
      %s2192 = int_to_ptr.vmem [resolvable:$true] %s2191
      %2197 = dma.vmem_to_hbm [thread:$0]  %s2192, 64, %s13, [#allocation15], 32, 32, 2
    $region81: #{lstm_encoder_forward.1} parent=1 // pred_fallthru
      _
    // Predicated region
    $region82: #{lstm_encoder_forward.1} parent=1 // pred_check
      _
    $region83: #{lstm_encoder_forward.1} parent=1 // pred_check_branch
      %2199 = sbr.rel (0) target = $region85
    $region84: #{lstm_encoder_forward.1} parent=1 // pred_region
      _
    $region85: #{lstm_encoder_forward.1} parent=1 // pred_fallthru
      _
    // Predicated region
    $region86: #{lstm_encoder_forward.1} parent=1 // pred_check
      _
    $region87: #{lstm_encoder_forward.1} parent=1 // pred_check_branch
      %2201 = sbr.rel (0) target = $region89
    $region88: #{lstm_encoder_forward.1} parent=1 // pred_region
      %2202 = dma.done [#allocation4], 64
    $region89: #{lstm_encoder_forward.1} parent=1 // pred_fallthru
      _
    // Predicated region
    $region90: #{lstm_encoder_forward.1} parent=1 // pred_check
      _
    $region91: #{lstm_encoder_forward.1} parent=1 // pred_check_branch
      %2204 = sbr.rel (0) target = $region93
    $region92: #{lstm_encoder_forward.1} parent=1 // pred_region
      %2205 = dma.done [#allocation15], 64
    $region93: #{lstm_encoder_forward.1} parent=1 // pred_fallthru
      _
    %2206 = vsyncpa [#allocation3], 1
    %2207 = vsyncpa [#allocation6], 1
    %2208 = vsyncpa [#allocation9], 1
    %2209 = vsyncpa [#allocation12], 1
    %2210 = vsyncpa [#allocation4], 1
    %2211 = vsyncpa [#allocation15], 1

</llo_original>
